<compile_context>
chip_gen: v7x
topology: tpu7x:2x2x1
jax: 0.10.0
libtpu: 0.0.40
codegen_flags: <defaults>
</compile_context>

<pallas_src>
import functools

import jax
import jax.numpy as jnp
from jax.experimental import pallas as pl
from jax.experimental.pallas import tpu as pltpu


# ---------------------------------------------------------------------------
# helpers
# ---------------------------------------------------------------------------
def _vmem_limit_bytes():
    # Generation-aware scoped-VMEM limit, leaving headroom under physical VMEM
    # (v7x: 64 MiB physical -> ~48 MiB; v5e/v6e: 128 MiB -> ~100 MiB).
    try:
        cap = int(pltpu.get_tpu_info().vmem_capacity_bytes)
    except Exception:
        cap = 64 * 1024 * 1024
    if cap <= 64 * 1024 * 1024:
        return 48 * 1024 * 1024
    return 100 * 1024 * 1024


def _elementwise_dtype(in_dtype):
    # bf16 elementwise math only where the VPU supports it (v6e / v7x);
    # v5e has no bf16 VALU, so keep f32 there.  f32 inputs always use f32.
    if jnp.dtype(in_dtype) != jnp.dtype(jnp.bfloat16):
        return jnp.float32
    try:
        kind = jax.devices()[0].device_kind.lower()
    except Exception:
        kind = ""
    if "v5 lite" in kind or "v5e" in kind or "v5lite" in kind:
        return jnp.float32
    return jnp.bfloat16


def _pick_hw_tile(hw, per_lane_bytes, budget_bytes):
    # Largest lane-dense (multiple of 128) divisor of hw whose per-grid-step
    # working set fits the budget; full extent if hw is not 128-aligned
    # (block == full array dim is always legal).
    # TODO(synk): for huge, non-128-aligned H*W, tile by rows (multiples of W).
    if hw % 128 != 0:
        return hw
    max_lanes = max(128, budget_bytes // max(per_lane_bytes, 1))
    cands = [d for d in range(128, hw + 1, 128) if hw % d == 0]
    fit = [d for d in cands if d <= max_lanes]
    return fit[-1] if fit else cands[0]


# ---------------------------------------------------------------------------
# Pass 1: HW-tiled pooling reduction + both CBAM gate FCs (tiny outputs)
# ---------------------------------------------------------------------------
def _cbam_gate(avg, mx, w1, w2):
    """sigmoid(fc(avg) + fc(max)) for pooled stats of shape (Cx, 1).

    The two FC passes are fused by stacking avg/max into one (Cx, 2) operand.
    This only runs once per batch (inside the last-tile pl.when), so the
    lane-width-2 operand cost is paid once, not per grid step.
    """
    pooled = jnp.concatenate([avg, mx], axis=-1)                        # (Cx, 2)
    h = jnp.maximum(jnp.dot(w1, pooled, preferred_element_type=jnp.float32), 0.0)
    y = jnp.dot(w2, h, preferred_element_type=jnp.float32)              # (Cx, 2)
    return jax.nn.sigmoid(y[:, 0:1] + y[:, 1:2])                        # (Cx, 1)


def _stats_gates_kernel(*refs, map_num, hw_total):
    # refs = (x_0..x_{m-1}, w1a, w2a, w1b, w2b, gate1_ref, gate2_ref,
    #         s1_sc, m1_sc, s2_sc, m2_sc)
    x_refs = refs[:map_num]
    w1a_ref, w2a_ref, w1b_ref, w2b_ref, g1_ref, g2_ref = refs[map_num:map_num + 6]
    s1_sc, m1_sc, s2_sc, m2_sc = refs[map_num + 6:]

    t = pl.program_id(1)

    @pl.when(t == 0)
    def _init():
        s1_sc[...] = jnp.zeros_like(s1_sc)
        s2_sc[...] = jnp.zeros_like(s2_sc)
        m1_sc[...] = jnp.full_like(m1_sc, -jnp.inf)
        m2_sc[...] = jnp.full_like(m2_sc, -jnp.inf)

    # Pooling math always in f32 (HW tiles exactly partition HW: running sum is
    # divided once at the end, max is a running max -> identical to global pool).
    maps = [r[0].astype(jnp.float32) for r in x_refs]                   # (C, hw_t)
    intra = maps[0]
    for m in maps[1:]:
        intra = intra + m                                               # (C, hw_t)

    # Channel stats of cat(x, dim=1) == per-map stats stacked in map order.
    s1_sc[...] += jnp.concatenate(
        [jnp.sum(m, axis=-1, keepdims=True) for m in maps], axis=0)     # (4C, 1)
    m1_sc[...] = jnp.maximum(
        m1_sc[...],
        jnp.concatenate([jnp.max(m, axis=-1, keepdims=True) for m in maps], axis=0))
    s2_sc[...] += jnp.sum(intra, axis=-1, keepdims=True)                # (C, 1)
    m2_sc[...] = jnp.maximum(m2_sc[...], jnp.max(intra, axis=-1, keepdims=True))

    @pl.when(t == pl.num_programs(1) - 1)
    def _finalize():
        inv_hw = jnp.float32(1.0 / hw_total)
        g1_ref[0] = _cbam_gate(s1_sc[...] * inv_hw, m1_sc[...],
                               w1a_ref[...], w2a_ref[...]).astype(g1_ref.dtype)
        g2_ref[0] = _cbam_gate(s2_sc[...] * inv_hw, m2_sc[...],
                               w1b_ref[...], w2b_ref[...]).astype(g2_ref.dtype)


# ---------------------------------------------------------------------------
# Pass 2: gated combine fused with ConvTranspose2d(2,2)+Conv1x1 per-pixel matmul
# ---------------------------------------------------------------------------
def _apply_up_kernel(*refs, map_num, ew_dtype):
    # refs = (x_0..x_{m-1}, gate1, gate2, wk, bk, o_ref)
    # x_m: (1, C, hw_t)   gate1: (1, 4C, 1)   gate2: (1, C, 1)
    # wk:  (K, 4C)        bk:    (K, 1)       o:     (1, K, hw_t)
    x_refs = refs[:map_num]
    g1_ref, g2_ref, wk_ref, bk_ref, o_ref = refs[map_num:]
    C = x_refs[0].shape[1]

    maps = [r[0].astype(ew_dtype) for r in x_refs]                      # (C, hw_t)
    intra = maps[0]
    for m in maps[1:]:
        intra = intra + m
    ca2 = intra * g2_ref[0].astype(ew_dtype)                            # (C, hw_t)

    g1 = g1_ref[0]                                                      # (4C, 1) f32
    wk = wk_ref[...]                                                    # (K, 4C)
    # y = wk @ cat_m(combined_m) computed as a sum of per-map partial dots, so
    # the (4C, hw_t) concat and tiled ca2 are never materialized.
    acc = bk_ref[...]                                                   # (K, 1) f32
    for m in range(map_num):
        gm = g1[m * C:(m + 1) * C, :].astype(ew_dtype)                  # (C, 1)
        comb = maps[m] * gm * (maps[m] + ca2)                           # (C, hw_t)
        acc = acc + jnp.dot(wk[:, m * C:(m + 1) * C], comb,
                            preferred_element_type=jnp.float32)         # (K, hw_t)
    o_ref[0] = acc.astype(o_ref.dtype)


# ---------------------------------------------------------------------------
# Wrapper
# ---------------------------------------------------------------------------
def ecam_forward(xs, w1a, w2a, w1b, w2b, wup, bup, wf, bf):
    """ECAM forward.

    xs:  list of map_num arrays, each NCHW (N, C, H, W)
    w1a: (4C//16, 4C), w2a: (4C, 4C//16)   -- ca1 1x1-conv weights (squeezed)
    w1b: (C//4,   C ), w2b: (C,  C//4  )   -- ca2 1x1-conv weights (squeezed)
    wup: (4C, 4C, 2, 2), bup: (4C,)        -- ConvTranspose2d weight/bias
    wf:  (out_ch, 4C),   bf:  (out_ch,)    -- final 1x1 conv weight/bias
    returns (N, out_ch, 2H, 2W)
    """
    map_num = len(xs)
    N, C, H, W = xs[0].shape
    HW = H * W
    C4 = C * map_num
    out_ch = wf.shape[0]
    K = out_ch * 4
    in_dtype = xs[0].dtype
    in_isz = jnp.dtype(in_dtype).itemsize

    ew_dtype = _elementwise_dtype(in_dtype)
    ew_isz = jnp.dtype(ew_dtype).itemsize

    vmem_limit = _vmem_limit_bytes()
    budget = vmem_limit // 2          # headroom for weights/gates/compiler scratch

    x_flat = [x.reshape(N, C, HW) for x in xs]      # free reshape, stays NCHW

    # ----- pass 1: pooled stats reduction + gates (reads xs once, writes ~KBs)
    per_lane_r = 2 * map_num * C * in_isz + (map_num + 1) * C * 4
    hw_tile_r = _pick_hw_tile(HW, per_lane_r, budget)

    gate1, gate2 = pl.pallas_call(
        functools.partial(_stats_gates_kernel, map_num=map_num, hw_total=HW),
        out_shape=(jax.ShapeDtypeStruct((N, C4, 1), jnp.float32),
                   jax.ShapeDtypeStruct((N, C, 1), jnp.float32)),
        grid_spec=pltpu.PrefetchScalarGridSpec(
            num_scalar_prefetch=0,
            grid=(N, HW // hw_tile_r),
            in_specs=(
                [pl.BlockSpec((1, C, hw_tile_r), lambda b, t: (b, 0, t))
                 for _ in range(map_num)]
                + [pl.BlockSpec((w1a.shape[0], C4), lambda b, t: (0, 0)),
                   pl.BlockSpec((C4, w2a.shape[1]), lambda b, t: (0, 0)),
                   pl.BlockSpec((w1b.shape[0], C), lambda b, t: (0, 0)),
                   pl.BlockSpec((C, w2b.shape[1]), lambda b, t: (0, 0))]),
            out_specs=[pl.BlockSpec((1, C4, 1), lambda b, t: (b, 0, 0)),
                       pl.BlockSpec((1, C, 1), lambda b, t: (b, 0, 0))],
            scratch_shapes=[pltpu.VMEM((C4, 1), jnp.float32),
                            pltpu.VMEM((C4, 1), jnp.float32),
                            pltpu.VMEM((C, 1), jnp.float32),
                            pltpu.VMEM((C, 1), jnp.float32)],
        ),
        compiler_params=pltpu.CompilerParams(
            dimension_semantics=("parallel", "arbitrary"),
            vmem_limit_bytes=vmem_limit),
    )(*x_flat, w1a, w2a, w1b, w2b)

    # ----- pre-fold the final 1x1 conv into the transposed conv (both linear):
    #   w_fused[i, o, a, b] = sum_c wup[i, c, a, b] * wf[o, c]
    #   b_fused[o]          = bf[o] + wf @ bup
    w_fused = jnp.einsum("icab,oc->ioab", wup, wf)            # (4C, out_ch, 2, 2)
    wk = jnp.transpose(w_fused.reshape(C4, K)).astype(ew_dtype)   # (K, 4C)
    b_fused = bf + wf @ bup                                   # (out_ch,)
    bk = jnp.broadcast_to(b_fused[:, None], (out_ch, 4)).reshape(K, 1)
    bk = bk.astype(jnp.float32)

    # ----- pass 2: gated combine + per-pixel matmul, HW-tiled + fully parallel
    per_lane_a = (2 * map_num * C * in_isz        # x blocks, double-buffered
                  + 2 * K * in_isz                # output block, double-buffered
                  + (map_num + 3) * C * ew_isz    # in-kernel temporaries
                  + K * 4)                        # f32 accumulator
    hw_tile_a = _pick_hw_tile(HW, per_lane_a, budget)

    y = pl.pallas_call(
        functools.partial(_apply_up_kernel, map_num=map_num, ew_dtype=ew_dtype),
        out_shape=jax.ShapeDtypeStruct((N, K, HW), in_dtype),
        grid_spec=pltpu.PrefetchScalarGridSpec(
            num_scalar_prefetch=0,
            grid=(N, HW // hw_tile_a),
            in_specs=(
                [pl.BlockSpec((1, C, hw_tile_a), lambda b, t: (b, 0, t))
                 for _ in range(map_num)]
                + [pl.BlockSpec((1, C4, 1), lambda b, t: (b, 0, 0)),
                   pl.BlockSpec((1, C, 1), lambda b, t: (b, 0, 0)),
                   pl.BlockSpec((K, C4), lambda b, t: (0, 0)),
                   pl.BlockSpec((K, 1), lambda b, t: (0, 0))]),
            out_specs=pl.BlockSpec((1, K, hw_tile_a), lambda b, t: (b, 0, t)),
        ),
        compiler_params=pltpu.CompilerParams(
            dimension_semantics=("parallel", "parallel"),
            vmem_limit_bytes=vmem_limit),
    )(*x_flat, gate1, gate2, wk, bk)

    # Scatter the per-pixel 2x2 taps into the 2x-upsampled spatial grid.
    # TODO(synk): fold this lane interleave into the kernel if out_ch is large;
    # for small out_ch it is a minor HBM pass left to XLA.
    y = y.reshape(N, out_ch, 2, 2, H, W)
    y = jnp.transpose(y, (0, 1, 4, 2, 5, 3)).reshape(N, out_ch, 2 * H, 2 * W)
    return y


# ---------------------------------------------------------------------------
# Pure-JAX reference mirroring the PyTorch module
# ---------------------------------------------------------------------------
def _reference(xs, w1a, w2a, w1b, w2b, wup, bup, wf, bf):
    def cbam(x, w1, w2):
        avg = jnp.mean(x, axis=(2, 3))
        mx = jnp.max(x, axis=(2, 3))

        def fc(y):
            return jnp.maximum(y @ w1.T, 0.0) @ w2.T

        gate = jax.nn.sigmoid(fc(avg) + fc(mx))
        return x * gate[:, :, None, None]

    map_num = len(xs)
    out = jnp.concatenate(xs, axis=1)
    intra = xs[0]
    for x in xs[1:]:
        intra = intra + x
    ca2 = cbam(intra, w1b, w2b)
    out = cbam(out, w1a, w2a) * (out + jnp.tile(ca2, (1, map_num, 1, 1)))

    # ConvTranspose2d(kernel=2, stride=2): each input pixel fills a 2x2 patch.
    N, C4, H, W = out.shape
    up = (jnp.einsum("nihw,icab->ncabhw", out, wup)
          + bup[None, :, None, None, None, None])
    up = jnp.transpose(up, (0, 1, 4, 2, 5, 3)).reshape(N, C4, 2 * H, 2 * W)
    return jnp.einsum("nchw,oc->nohw", up, wf) + bf[None, :, None, None]


# ---------------------------------------------------------------------------
if __name__ == "__main__":
    # Small shapes consistent with ECAM: in_channels=8, map_num=4, out_channels=2
    N, Cin, H, W = 2, 8, 16, 16
    map_num = 4
    out_channels = 2
    C4 = Cin * map_num            # 32
    Cr1 = C4 // 16                # ca1: CBAMChannel(4C, reduction=16) -> 2
    Cr2 = Cin // 4                # ca2: CBAMChannel(C, reduction=16//4) -> 2

    key = jax.random.PRNGKey(0)
    keys = jax.random.split(key, 12)
    xs = [jax.random.normal(keys[i], (N, Cin, H, W), dtype=jnp.float32)
          for i in range(map_num)]
    # 1x1-conv weights with the trailing (1,1) dims squeezed.
    w1a = jax.random.normal(keys[4], (Cr1, C4), dtype=jnp.float32) * 0.1
    w2a = jax.random.normal(keys[5], (C4, Cr1), dtype=jnp.float32) * 0.1
    w1b = jax.random.normal(keys[6], (Cr2, Cin), dtype=jnp.float32) * 0.1
    w2b = jax.random.normal(keys[7], (Cin, Cr2), dtype=jnp.float32) * 0.1
    # ConvTranspose2d(4C, 4C, 2, stride=2) weight/bias; final Conv2d(4C, out, 1).
    wup = jax.random.normal(keys[8], (C4, C4, 2, 2), dtype=jnp.float32) * 0.1
    bup = jax.random.normal(keys[9], (C4,), dtype=jnp.float32) * 0.1
    wf = jax.random.normal(keys[10], (out_channels, C4), dtype=jnp.float32) * 0.1
    bf = jax.random.normal(keys[11], (out_channels,), dtype=jnp.float32) * 0.1

    out = ecam_forward(xs, w1a, w2a, w1b, w2b, wup, bup, wf, bf)
    out = jax.block_until_ready(out)

    ref = _reference(xs, w1a, w2a, w1b, w2b, wup, bup, wf, bf)
    assert out.shape == (N, out_channels, 2 * H, 2 * W)
    max_err = jnp.max(jnp.abs(out - ref))
    assert jnp.allclose(out, ref, atol=1e-4, rtol=1e-4), f"mismatch: {max_err}"

    print("KERNEL_OK")
</pallas_src>

<mosaic_0001>
module attributes {stable_mosaic.version = 11 : i64} {
  func.func @_stats_gates_kernel(%arg0: i32, %arg1: i32, %arg2: memref<1x8x256xf32, #tpu.memory_space<vmem>>, %arg3: memref<1x8x256xf32, #tpu.memory_space<vmem>>, %arg4: memref<1x8x256xf32, #tpu.memory_space<vmem>>, %arg5: memref<1x8x256xf32, #tpu.memory_space<vmem>>, %arg6: memref<2x32xf32, #tpu.memory_space<vmem>>, %arg7: memref<32x2xf32, #tpu.memory_space<vmem>>, %arg8: memref<2x8xf32, #tpu.memory_space<vmem>>, %arg9: memref<8x2xf32, #tpu.memory_space<vmem>>, %arg10: memref<1x32x1xf32, #tpu.memory_space<vmem>>, %arg11: memref<1x8x1xf32, #tpu.memory_space<vmem>>, %arg12: memref<32x1xf32, #tpu.memory_space<vmem>>, %arg13: memref<32x1xf32, #tpu.memory_space<vmem>>, %arg14: memref<8x1xf32, #tpu.memory_space<vmem>>, %arg15: memref<8x1xf32, #tpu.memory_space<vmem>>) attributes {dimension_semantics = [#tpu.dimension_semantics<parallel>, #tpu.dimension_semantics<arbitrary>], iteration_bounds = array<i64: 2, 1>, scalar_prefetch = 0 : i64, scratch_operands = 4 : i64, tpu.core_type = #tpu.core_type<tc>, window_params = [{transform_indices = @transform_0, window_bounds = array<i64: 1, 8, 256>}, {transform_indices = @transform_1, window_bounds = array<i64: 1, 8, 256>}, {transform_indices = @transform_2, window_bounds = array<i64: 1, 8, 256>}, {transform_indices = @transform_3, window_bounds = array<i64: 1, 8, 256>}, {pipeline_mode = #tpu.pipeline_mode<synchronous>, transform_indices = @transform_4, window_bounds = array<i64: 2, 32>}, {pipeline_mode = #tpu.pipeline_mode<synchronous>, transform_indices = @transform_5, window_bounds = array<i64: 32, 2>}, {pipeline_mode = #tpu.pipeline_mode<synchronous>, transform_indices = @transform_6, window_bounds = array<i64: 2, 8>}, {pipeline_mode = #tpu.pipeline_mode<synchronous>, transform_indices = @transform_7, window_bounds = array<i64: 8, 2>}, {transform_indices = @transform_8, window_bounds = array<i64: 1, 32, 1>}, {transform_indices = @transform_9, window_bounds = array<i64: 1, 8, 1>}]} {
    %c0_i32 = arith.constant 0 : i32
    %0 = arith.cmpi eq, %arg1, %c0_i32 : i32
    %1 = arith.extui %0 : i1 to i32
    %c0_i32_0 = arith.constant 0 : i32
    %2 = arith.cmpi ne, %1, %c0_i32_0 : i32
    scf.if %2 {
      %cst_39 = arith.constant 0.000000e+00 : f32
      %51 = vector.broadcast %cst_39 : f32 to vector<32x1xf32>
      %c0_40 = arith.constant 0 : index
      %c0_41 = arith.constant 0 : index
      %52 = vector.load %arg12[%c0_40, %c0_41] : memref<32x1xf32, #tpu.memory_space<vmem>>, vector<32x1xf32>
      tpu.vector_store %arg12[%c0_40, %c0_41], %51 {strides = array<i32>} : memref<32x1xf32, #tpu.memory_space<vmem>>, vector<32x1xf32>,
      %cst_42 = arith.constant 0.000000e+00 : f32
      %53 = vector.broadcast %cst_42 : f32 to vector<8x1xf32>
      %c0_43 = arith.constant 0 : index
      %c0_44 = arith.constant 0 : index
      %54 = vector.load %arg14[%c0_43, %c0_44] : memref<8x1xf32, #tpu.memory_space<vmem>>, vector<8x1xf32>
      tpu.vector_store %arg14[%c0_43, %c0_44], %53 {strides = array<i32>} : memref<8x1xf32, #tpu.memory_space<vmem>>, vector<8x1xf32>,
      %cst_45 = arith.constant 0xFF800000 : f32
      %55 = vector.broadcast %cst_45 : f32 to vector<32x1xf32>
      %c0_46 = arith.constant 0 : index
      %c0_47 = arith.constant 0 : index
      %56 = vector.load %arg13[%c0_46, %c0_47] : memref<32x1xf32, #tpu.memory_space<vmem>>, vector<32x1xf32>
      tpu.vector_store %arg13[%c0_46, %c0_47], %55 {strides = array<i32>} : memref<32x1xf32, #tpu.memory_space<vmem>>, vector<32x1xf32>,
      %cst_48 = arith.constant 0xFF800000 : f32
      %57 = vector.broadcast %cst_48 : f32 to vector<8x1xf32>
      %c0_49 = arith.constant 0 : index
      %c0_50 = arith.constant 0 : index
      %58 = vector.load %arg15[%c0_49, %c0_50] : memref<8x1xf32, #tpu.memory_space<vmem>>, vector<8x1xf32>
      tpu.vector_store %arg15[%c0_49, %c0_50], %57 {strides = array<i32>} : memref<8x1xf32, #tpu.memory_space<vmem>>, vector<8x1xf32>,
    } else {
    }
    %c0 = arith.constant 0 : index
    %c0_1 = arith.constant 0 : index
    %c0_2 = arith.constant 0 : index
    %3 = vector.load %arg2[%c0, %c0_1, %c0_2] : memref<1x8x256xf32, #tpu.memory_space<vmem>>, vector<1x8x256xf32>
    %4 = vector.shape_cast %3 : vector<1x8x256xf32> to vector<8x256xf32>
    %c0_3 = arith.constant 0 : index
    %c0_4 = arith.constant 0 : index
    %c0_5 = arith.constant 0 : index
    %5 = vector.load %arg3[%c0_3, %c0_4, %c0_5] : memref<1x8x256xf32, #tpu.memory_space<vmem>>, vector<1x8x256xf32>
    %6 = vector.shape_cast %5 : vector<1x8x256xf32> to vector<8x256xf32>
    %c0_6 = arith.constant 0 : index
    %c0_7 = arith.constant 0 : index
    %c0_8 = arith.constant 0 : index
    %7 = vector.load %arg4[%c0_6, %c0_7, %c0_8] : memref<1x8x256xf32, #tpu.memory_space<vmem>>, vector<1x8x256xf32>
    %8 = vector.shape_cast %7 : vector<1x8x256xf32> to vector<8x256xf32>
    %c0_9 = arith.constant 0 : index
    %c0_10 = arith.constant 0 : index
    %c0_11 = arith.constant 0 : index
    %9 = vector.load %arg5[%c0_9, %c0_10, %c0_11] : memref<1x8x256xf32, #tpu.memory_space<vmem>>, vector<1x8x256xf32>
    %10 = vector.shape_cast %9 : vector<1x8x256xf32> to vector<8x256xf32>
    %11 = arith.addf %4, %6 : vector<8x256xf32>
    %12 = arith.addf %11, %8 : vector<8x256xf32>
    %13 = arith.addf %12, %10 : vector<8x256xf32>
    %c0_12 = arith.constant 0 : index
    %c0_13 = arith.constant 0 : index
    %14 = vector.load %arg12[%c0_12, %c0_13] : memref<32x1xf32, #tpu.memory_space<vmem>>, vector<32x1xf32>
    %cst = arith.constant dense<0.000000e+00> : vector<8xf32>
    %15 = vector.multi_reduction <add>, %4, %cst [1] : vector<8x256xf32> to vector<8xf32>
    %16 = vector.shape_cast %15 : vector<8xf32> to vector<8x1xf32>
    %cst_14 = arith.constant dense<0.000000e+00> : vector<8xf32>
    %17 = vector.multi_reduction <add>, %6, %cst_14 [1] : vector<8x256xf32> to vector<8xf32>
    %18 = vector.shape_cast %17 : vector<8xf32> to vector<8x1xf32>
    %cst_15 = arith.constant dense<0.000000e+00> : vector<8xf32>
    %19 = vector.multi_reduction <add>, %8, %cst_15 [1] : vector<8x256xf32> to vector<8xf32>
    %20 = vector.shape_cast %19 : vector<8xf32> to vector<8x1xf32>
    %cst_16 = arith.constant dense<0.000000e+00> : vector<8xf32>
    %21 = vector.multi_reduction <add>, %10, %cst_16 [1] : vector<8x256xf32> to vector<8xf32>
    %22 = vector.shape_cast %21 : vector<8xf32> to vector<8x1xf32>
    %23 = tpu.concatenate %16, %18, %20, %22 in 0 : vector<8x1xf32>, vector<8x1xf32>, vector<8x1xf32>, vector<8x1xf32> -> vector<32x1xf32>
    %24 = arith.addf %14, %23 : vector<32x1xf32>
    %c0_17 = arith.constant 0 : index
    %c0_18 = arith.constant 0 : index
    %25 = vector.load %arg12[%c0_17, %c0_18] : memref<32x1xf32, #tpu.memory_space<vmem>>, vector<32x1xf32>
    tpu.vector_store %arg12[%c0_17, %c0_18], %24 {strides = array<i32>} : memref<32x1xf32, #tpu.memory_space<vmem>>, vector<32x1xf32>,
    %c0_19 = arith.constant 0 : index
    %c0_20 = arith.constant 0 : index
    %26 = vector.load %arg13[%c0_19, %c0_20] : memref<32x1xf32, #tpu.memory_space<vmem>>, vector<32x1xf32>
    %cst_21 = arith.constant dense<0xFF800000> : vector<8xf32>
    %27 = vector.multi_reduction <maximumf>, %4, %cst_21 [1] : vector<8x256xf32> to vector<8xf32>
    %28 = vector.shape_cast %27 : vector<8xf32> to vector<8x1xf32>
    %cst_22 = arith.constant dense<0xFF800000> : vector<8xf32>
    %29 = vector.multi_reduction <maximumf>, %6, %cst_22 [1] : vector<8x256xf32> to vector<8xf32>
    %30 = vector.shape_cast %29 : vector<8xf32> to vector<8x1xf32>
    %cst_23 = arith.constant dense<0xFF800000> : vector<8xf32>
    %31 = vector.multi_reduction <maximumf>, %8, %cst_23 [1] : vector<8x256xf32> to vector<8xf32>
    %32 = vector.shape_cast %31 : vector<8xf32> to vector<8x1xf32>
    %cst_24 = arith.constant dense<0xFF800000> : vector<8xf32>
    %33 = vector.multi_reduction <maximumf>, %10, %cst_24 [1] : vector<8x256xf32> to vector<8xf32>
    %34 = vector.shape_cast %33 : vector<8xf32> to vector<8x1xf32>
    %35 = tpu.concatenate %28, %30, %32, %34 in 0 : vector<8x1xf32>, vector<8x1xf32>, vector<8x1xf32>, vector<8x1xf32> -> vector<32x1xf32>
    %36 = arith.maximumf %26, %35 : vector<32x1xf32>
    %c0_25 = arith.constant 0 : index
    %c0_26 = arith.constant 0 : index
    %37 = vector.load %arg13[%c0_25, %c0_26] : memref<32x1xf32, #tpu.memory_space<vmem>>, vector<32x1xf32>
    tpu.vector_store %arg13[%c0_25, %c0_26], %36 {strides = array<i32>} : memref<32x1xf32, #tpu.memory_space<vmem>>, vector<32x1xf32>,
    %c0_27 = arith.constant 0 : index
    %c0_28 = arith.constant 0 : index
    %38 = vector.load %arg14[%c0_27, %c0_28] : memref<8x1xf32, #tpu.memory_space<vmem>>, vector<8x1xf32>
    %cst_29 = arith.constant dense<0.000000e+00> : vector<8xf32>
    %39 = vector.multi_reduction <add>, %13, %cst_29 [1] : vector<8x256xf32> to vector<8xf32>
    %40 = vector.shape_cast %39 : vector<8xf32> to vector<8x1xf32>
    %41 = arith.addf %38, %40 : vector<8x1xf32>
    %c0_30 = arith.constant 0 : index
    %c0_31 = arith.constant 0 : index
    %42 = vector.load %arg14[%c0_30, %c0_31] : memref<8x1xf32, #tpu.memory_space<vmem>>, vector<8x1xf32>
    tpu.vector_store %arg14[%c0_30, %c0_31], %41 {strides = array<i32>} : memref<8x1xf32, #tpu.memory_space<vmem>>, vector<8x1xf32>,
    %c0_32 = arith.constant 0 : index
    %c0_33 = arith.constant 0 : index
    %43 = vector.load %arg15[%c0_32, %c0_33] : memref<8x1xf32, #tpu.memory_space<vmem>>, vector<8x1xf32>
    %cst_34 = arith.constant dense<0xFF800000> : vector<8xf32>
    %44 = vector.multi_reduction <maximumf>, %13, %cst_34 [1] : vector<8x256xf32> to vector<8xf32>
    %45 = vector.shape_cast %44 : vector<8xf32> to vector<8x1xf32>
    %46 = arith.maximumf %43, %45 : vector<8x1xf32>
    %c0_35 = arith.constant 0 : index
    %c0_36 = arith.constant 0 : index
    %47 = vector.load %arg15[%c0_35, %c0_36] : memref<8x1xf32, #tpu.memory_space<vmem>>, vector<8x1xf32>
    tpu.vector_store %arg15[%c0_35, %c0_36], %46 {strides = array<i32>} : memref<8x1xf32, #tpu.memory_space<vmem>>, vector<8x1xf32>,
    %c0_i32_37 = arith.constant 0 : i32
    %48 = arith.cmpi eq, %arg1, %c0_i32_37 : i32
    %49 = arith.extui %48 : i1 to i32
    %c0_i32_38 = arith.constant 0 : i32
    %50 = arith.cmpi ne, %49, %c0_i32_38 : i32
    scf.if %50 {
      %c0_39 = arith.constant 0 : index
      %c0_40 = arith.constant 0 : index
      %51 = vector.load %arg12[%c0_39, %c0_40] : memref<32x1xf32, #tpu.memory_space<vmem>>, vector<32x1xf32>
      %cst_41 = arith.constant 3.906250e-03 : f32
      %52 = vector.broadcast %cst_41 : f32 to vector<32x1xf32>
      %53 = arith.mulf %51, %52 : vector<32x1xf32>
      %c0_42 = arith.constant 0 : index
      %c0_43 = arith.constant 0 : index
      %54 = vector.load %arg13[%c0_42, %c0_43] : memref<32x1xf32, #tpu.memory_space<vmem>>, vector<32x1xf32>
      %c0_44 = arith.constant 0 : index
      %c0_45 = arith.constant 0 : index
      %55 = vector.load %arg6[%c0_44, %c0_45] : memref<2x32xf32, #tpu.memory_space<vmem>>, vector<2x32xf32>
      %c0_46 = arith.constant 0 : index
      %c0_47 = arith.constant 0 : index
      %56 = vector.load %arg7[%c0_46, %c0_47] : memref<32x2xf32, #tpu.memory_space<vmem>>, vector<32x2xf32>
      %57 = tpu.concatenate %53, %54 in 1 : vector<32x1xf32>, vector<32x1xf32> -> vector<32x2xf32>
      %cst_48 = arith.constant dense<0.000000e+00> : vector<2x2xf32>
      %58 = tpu.matmul %55, %57, %cst_48 {dimension_numbers = #tpu.dot_dimension_numbers<[1], [0], [0], [1], [0, 0, 1, 1], [], []>} : vector<2x32xf32>, vector<32x2xf32>, vector<2x2xf32> -> vector<2x2xf32>
      %cst_49 = arith.constant 0.000000e+00 : f32
      %59 = vector.broadcast %cst_49 : f32 to vector<2x2xf32>
      %60 = arith.maximumf %58, %59 : vector<2x2xf32>
      %cst_50 = arith.constant dense<0.000000e+00> : vector<32x2xf32>
      %61 = tpu.matmul %56, %60, %cst_50 {dimension_numbers = #tpu.dot_dimension_numbers<[1], [0], [0], [1], [0, 0, 1, 1], [], []>} : vector<32x2xf32>, vector<2x2xf32>, vector<32x2xf32> -> vector<32x2xf32>
      %62 = vector.extract_strided_slice %61 {offsets = [0, 0], sizes = [32, 1], strides = [1, 1]} : vector<32x2xf32> to vector<32x1xf32>
      %63 = vector.extract_strided_slice %61 {offsets = [0, 1], sizes = [32, 1], strides = [1, 1]} : vector<32x2xf32> to vector<32x1xf32>
      %64 = arith.addf %62, %63 : vector<32x1xf32>
      %65 = arith.negf %64 : vector<32x1xf32>
      %66 = math.exp %65 : vector<32x1xf32>
      %cst_51 = arith.constant 1.000000e+00 : f32
      %67 = vector.broadcast %cst_51 : f32 to vector<32x1xf32>
      %68 = arith.addf %67, %66 : vector<32x1xf32>
      %69 = arith.divf %67, %68 : vector<32x1xf32>
      %c0_52 = arith.constant 0 : index
      %c0_53 = arith.constant 0 : index
      %c0_54 = arith.constant 0 : index
      %70 = vector.load %arg10[%c0_52, %c0_53, %c0_54] : memref<1x32x1xf32, #tpu.memory_space<vmem>>, vector<1x32x1xf32>
      %71 = vector.shape_cast %70 : vector<1x32x1xf32> to vector<32x1xf32>
      %72 = vector.shape_cast %69 : vector<32x1xf32> to vector<1x32x1xf32>
      tpu.vector_store %arg10[%c0_52, %c0_53, %c0_54], %72 {strides = array<i32>} : memref<1x32x1xf32, #tpu.memory_space<vmem>>, vector<1x32x1xf32>,
      %c0_55 = arith.constant 0 : index
      %c0_56 = arith.constant 0 : index
      %73 = vector.load %arg14[%c0_55, %c0_56] : memref<8x1xf32, #tpu.memory_space<vmem>>, vector<8x1xf32>
      %cst_57 = arith.constant 3.906250e-03 : f32
      %74 = vector.broadcast %cst_57 : f32 to vector<8x1xf32>
      %75 = arith.mulf %73, %74 : vector<8x1xf32>
      %c0_58 = arith.constant 0 : index
      %c0_59 = arith.constant 0 : index
      %76 = vector.load %arg15[%c0_58, %c0_59] : memref<8x1xf32, #tpu.memory_space<vmem>>, vector<8x1xf32>
      %c0_60 = arith.constant 0 : index
      %c0_61 = arith.constant 0 : index
      %77 = vector.load %arg8[%c0_60, %c0_61] : memref<2x8xf32, #tpu.memory_space<vmem>>, vector<2x8xf32>
      %c0_62 = arith.constant 0 : index
      %c0_63 = arith.constant 0 : index
      %78 = vector.load %arg9[%c0_62, %c0_63] : memref<8x2xf32, #tpu.memory_space<vmem>>, vector<8x2xf32>
      %79 = tpu.concatenate %75, %76 in 1 : vector<8x1xf32>, vector<8x1xf32> -> vector<8x2xf32>
      %cst_64 = arith.constant dense<0.000000e+00> : vector<2x2xf32>
      %80 = tpu.matmul %77, %79, %cst_64 {dimension_numbers = #tpu.dot_dimension_numbers<[1], [0], [0], [1], [0, 0, 1, 1], [], []>} : vector<2x8xf32>, vector<8x2xf32>, vector<2x2xf32> -> vector<2x2xf32>
      %cst_65 = arith.constant 0.000000e+00 : f32
      %81 = vector.broadcast %cst_65 : f32 to vector<2x2xf32>
      %82 = arith.maximumf %80, %81 : vector<2x2xf32>
      %cst_66 = arith.constant dense<0.000000e+00> : vector<8x2xf32>
      %83 = tpu.matmul %78, %82, %cst_66 {dimension_numbers = #tpu.dot_dimension_numbers<[1], [0], [0], [1], [0, 0, 1, 1], [], []>} : vector<8x2xf32>, vector<2x2xf32>, vector<8x2xf32> -> vector<8x2xf32>
      %84 = vector.extract_strided_slice %83 {offsets = [0, 0], sizes = [8, 1], strides = [1, 1]} : vector<8x2xf32> to vector<8x1xf32>
      %85 = vector.extract_strided_slice %83 {offsets = [0, 1], sizes = [8, 1], strides = [1, 1]} : vector<8x2xf32> to vector<8x1xf32>
      %86 = arith.addf %84, %85 : vector<8x1xf32>
      %87 = arith.negf %86 : vector<8x1xf32>
      %88 = math.exp %87 : vector<8x1xf32>
      %cst_67 = arith.constant 1.000000e+00 : f32
      %89 = vector.broadcast %cst_67 : f32 to vector<8x1xf32>
      %90 = arith.addf %89, %88 : vector<8x1xf32>
      %91 = arith.divf %89, %90 : vector<8x1xf32>
      %c0_68 = arith.constant 0 : index
      %c0_69 = arith.constant 0 : index
      %c0_70 = arith.constant 0 : index
      %92 = vector.load %arg11[%c0_68, %c0_69, %c0_70] : memref<1x8x1xf32, #tpu.memory_space<vmem>>, vector<1x8x1xf32>
      %93 = vector.shape_cast %92 : vector<1x8x1xf32> to vector<8x1xf32>
      %94 = vector.shape_cast %91 : vector<8x1xf32> to vector<1x8x1xf32>
      tpu.vector_store %arg11[%c0_68, %c0_69, %c0_70], %94 {strides = array<i32>} : memref<1x8x1xf32, #tpu.memory_space<vmem>>, vector<1x8x1xf32>,
    } else {
    }
    return
  }
  func.func @transform_0(%arg0: i32, %arg1: i32) -> (i32, i32, i32) {
    %c0_i32 = arith.constant 0 : i32
    %c0_i32_0 = arith.constant 0 : i32
    return %arg0, %c0_i32, %arg1 : i32, i32, i32
  }
  func.func @transform_1(%arg0: i32, %arg1: i32) -> (i32, i32, i32) {
    %c0_i32 = arith.constant 0 : i32
    %c0_i32_0 = arith.constant 0 : i32
    return %arg0, %c0_i32, %arg1 : i32, i32, i32
  }
  func.func @transform_2(%arg0: i32, %arg1: i32) -> (i32, i32, i32) {
    %c0_i32 = arith.constant 0 : i32
    %c0_i32_0 = arith.constant 0 : i32
    return %arg0, %c0_i32, %arg1 : i32, i32, i32
  }
  func.func @transform_3(%arg0: i32, %arg1: i32) -> (i32, i32, i32) {
    %c0_i32 = arith.constant 0 : i32
    %c0_i32_0 = arith.constant 0 : i32
    return %arg0, %c0_i32, %arg1 : i32, i32, i32
  }
  func.func @transform_4(%arg0: i32, %arg1: i32) -> (i32, i32) {
    %c0_i32 = arith.constant 0 : i32
    %c0_i32_0 = arith.constant 0 : i32
    %c0_i32_1 = arith.constant 0 : i32
    return %c0_i32, %c0_i32_0 : i32, i32
  }
  func.func @transform_5(%arg0: i32, %arg1: i32) -> (i32, i32) {
    %c0_i32 = arith.constant 0 : i32
    %c0_i32_0 = arith.constant 0 : i32
    %c0_i32_1 = arith.constant 0 : i32
    return %c0_i32, %c0_i32_0 : i32, i32
  }
  func.func @transform_6(%arg0: i32, %arg1: i32) -> (i32, i32) {
    %c0_i32 = arith.constant 0 : i32
    %c0_i32_0 = arith.constant 0 : i32
    %c0_i32_1 = arith.constant 0 : i32
    return %c0_i32, %c0_i32_0 : i32, i32
  }
  func.func @transform_7(%arg0: i32, %arg1: i32) -> (i32, i32) {
    %c0_i32 = arith.constant 0 : i32
    %c0_i32_0 = arith.constant 0 : i32
    %c0_i32_1 = arith.constant 0 : i32
    return %c0_i32, %c0_i32_0 : i32, i32
  }
  func.func @transform_8(%arg0: i32, %arg1: i32) -> (i32, i32, i32) {
    %c0_i32 = arith.constant 0 : i32
    %c0_i32_0 = arith.constant 0 : i32
    %c0_i32_1 = arith.constant 0 : i32
    return %arg0, %c0_i32, %c0_i32_0 : i32, i32, i32
  }
  func.func @transform_9(%arg0: i32, %arg1: i32) -> (i32, i32, i32) {
    %c0_i32 = arith.constant 0 : i32
    %c0_i32_0 = arith.constant 0 : i32
    %c0_i32_1 = arith.constant 0 : i32
    return %arg0, %c0_i32, %c0_i32_0 : i32, i32, i32
  }
}

</mosaic_0001>

<llo_original>
// kernel: tpu_custom_call.1
$region0: #{tpu_custom_call.1}
  #allocation0 [shape = 'u32[]', space=smem, size = 0x4, offset = 0x4, fixed_abs, tag = 'smem constant byte address 0x4 - core index']
  #allocation1 [shape = 'u32[144,128]{1,0:T(1,128)}', space=vmem, size = 0x12000, scoped, tag = 'internal scratch']
  #allocation2 [shape = 'f32[32,1]{1,0:T(8,128)}', space=vmem, size = 0x4000, scoped, tag = 'scratch operand']
  #allocation3 [shape = 'f32[32,1]{1,0:T(8,128)}', space=vmem, size = 0x4000, scoped, tag = 'scratch operand']
  #allocation4 [shape = 'f32[8,1]{1,0:T(8,128)}', space=vmem, size = 0x1000, scoped, tag = 'scratch operand']
  #allocation5 [shape = 'f32[8,1]{1,0:T(8,128)}', space=vmem, size = 0x1000, scoped, tag = 'scratch operand']
  %s0 = inlined_call_operand.vmem [shape: f32[2,8,256], index: 0, kind: input, shape index: {}]
  %s1 = inlined_call_operand.hbm [shape: f32[2,8,256], index: 1, kind: input, shape index: {}]
  %s2 = inlined_call_operand.hbm [shape: f32[2,8,256], index: 2, kind: input, shape index: {}]
  %s3 = inlined_call_operand.hbm [shape: f32[2,8,256], index: 3, kind: input, shape index: {}]
  %s4 = inlined_call_operand.vmem [shape: f32[2,32], index: 4, kind: input, shape index: {}]
  %s5 = inlined_call_operand.vmem [shape: f32[32,2], index: 5, kind: input, shape index: {}]
  %s6 = inlined_call_operand.vmem [shape: f32[2,8], index: 6, kind: input, shape index: {}]
  %s7 = inlined_call_operand.vmem [shape: f32[8,2], index: 7, kind: input, shape index: {}]
  %s8 = inlined_call_operand.vmem [shape: f32[2,32,1], index: 8, kind: output, shape index: {0}]
  %s9 = inlined_call_operand.vmem [shape: f32[2,8,1], index: 9, kind: output, shape index: {1}]
  %10 = xla_tuple %s8, %s9
  %s11 = sld [smem:[#allocation0]]
  $region93: #{tpu_custom_call.1} parent=0
    _
  %s13 = ssub.s32 1, %s11
  %s14 = scalar_select 0, %s13, %s11
  $region1: #{tpu_custom_call.1} parent=0
    #allocation6 [shape = 'u8[16384]{0}', space=vmem, size = 0x4000, scoped, tag = 'input window, operand 1']
    #allocation7 [shape = 's32[2]{0}', space=sflag, size = 0x8, scoped, tag = 'scoped memory for tpu_custom_call.1']
    #allocation8 [shape = 'u8[16384]{0}', space=vmem, size = 0x4000, scoped, tag = 'input window, operand 2']
    #allocation9 [shape = 's32[2]{0}', space=sflag, size = 0x8, scoped, tag = 'scoped memory for tpu_custom_call.1']
    #allocation10 [shape = 'u8[16384]{0}', space=vmem, size = 0x4000, scoped, tag = 'input window, operand 3']
    %15 = vsyncpa [#allocation7], 0
    %s16 = scalar_lea.sflag [#allocation7], 1
    %17 = vsyncpa %s16, 0
    %18 = vsyncpa [#allocation9], 0
    %s19 = scalar_lea.sflag [#allocation9], 1
    %20 = vsyncpa %s19, 0
    loop: start=0, step=1, limit=4
    $region2: #{tpu_custom_call.1} parent=1 // loop_pre_header
      _
    $region3: #{tpu_custom_call.1} parent=1 // loop_header
      %s22 = sphi 0, %s26
      %p23 = scmp.ge.s32.totalorder %s22, 4
      %s29 = sphi 0, %s41
      %s30 = sphi 0, %s37
      %s31 = sphi 0, %s29
      %s32 = sphi 0, %s30
      %s33 = sphi 0, %s31
      %s34 = sphi 0, %s32
      %s46 = sphi 0, %s48
      %s49 = sphi 0, %s46
      %s50 = sphi 0, %s49
      %s66 = sphi 0, %s50
      %s74 = sphi 0, %s76
      %s77 = sphi 0, %s74
      %s78 = sphi 0, %s77
      %s94 = sphi 0, %s78
      %s102 = sphi 0, %s104
      %s105 = sphi 0, %s102
      %s106 = sphi 0, %s105
      %s122 = sphi 0, %s106
      %s130 = sphi 0, %s132
      %s133 = sphi 0, %s130
      %s134 = sphi 0, %s133
      %s150 = sphi 0, %s134
      %s154 = sphi 0, %s154
      %s156 = sphi 0, %s154
      %s157 = sphi 0, %s156
      %s171 = sphi 0, %s157
      %s175 = sphi 0, %s175
      %s177 = sphi 0, %s175
      %s178 = sphi 0, %s177
      %s192 = sphi 0, %s178
      %s196 = sphi 0, %s196
      %s198 = sphi 0, %s196
      %s199 = sphi 0, %s198
      %s213 = sphi 0, %s199
      %s217 = sphi 0, %s217
      %s219 = sphi 0, %s217
      %s220 = sphi 0, %s219
      %s234 = sphi 0, %s220
      %s240 = sphi 0, %s242
      %s243 = sphi 0, %s240
      %s244 = sphi 0, %s243
      %s260 = sphi 0, %s244
      %s266 = sphi 0, %s268
      %s269 = sphi 0, %s266
      %s270 = sphi 0, %s269
      %s286 = sphi 0, %s270
    $region4: #{tpu_custom_call.1} parent=1 // loop_header_branch
      %25 = sbr.rel (%p23) target = $region8
    $region5: #{tpu_custom_call.1} parent=1 // loop_body
      %s27 = ssub.s32 %s22, 1
      %s28 = ssub.s32 %s22, 2
      %s35 = sadd.s32 1, %s30
      %p36 = scmp.ge.s32.totalorder %s35, 1
      %s37 = scalar_select %p36, 0, %s35
      %s38 = sadd.s32 1, %s29
      %s39 = scalar_select %p36, %s38, %s29
      %p40 = scmp.ge.s32.totalorder %s39, 2
      %s41 = scalar_select %p40, 0, %s39
      %s42 = ssub.s32 %s29, %s41
      %s43 = ssub.s32 %s30, %s37
      %s44 = sor.u32 %s42, %s43
      %p45 = scmp.eq.s32.totalorder %s44, 0
      %s47 = sadd.s32 %s46, 1
      %s48 = scalar_select %p45, %s46, %s47
      %p51 = pneg %p45
      %p52 = scmp.eq.s32.totalorder %s22, 1
      %p53 = por %p51, %p52
      %p54 = scmp.ne.s32.totalorder %s46, %s49
      %p55 = scmp.eq.s32.totalorder %s22, 0
      %p56 = por %p54, %p55
      %p57 = scmp.ne.s32.totalorder %s46, %s49
      %p58 = scmp.eq.s32.totalorder %s27, 1
      %p59 = por %p57, %p58
      %p60 = scmp.ne.s32.totalorder %s49, %s50
      %p61 = scmp.eq.s32.totalorder %s27, 0
      %p62 = por %p60, %p61
      %p63 = scmp.ne.s32.totalorder %s49, %s50
      %p64 = scmp.eq.s32.totalorder %s28, 1
      %p65 = por %p63, %p64
      %p67 = scmp.ne.s32.totalorder %s50, %s66
      %p68 = scmp.eq.s32.totalorder %s28, 0
      %p69 = por %p67, %p68
      %s70 = ssub.s32 %s29, %s41
      %s71 = ssub.s32 %s30, %s37
      %s72 = sor.u32 %s70, %s71
      %p73 = scmp.eq.s32.totalorder %s72, 0
      %s75 = sadd.s32 %s74, 1
      %s76 = scalar_select %p73, %s74, %s75
      %p79 = pneg %p73
      %p80 = scmp.eq.s32.totalorder %s22, 1
      %p81 = por %p79, %p80
      %p82 = scmp.ne.s32.totalorder %s74, %s77
      %p83 = scmp.eq.s32.totalorder %s22, 0
      %p84 = por %p82, %p83
      %p85 = scmp.ne.s32.totalorder %s74, %s77
      %p86 = scmp.eq.s32.totalorder %s27, 1
      %p87 = por %p85, %p86
      %p88 = scmp.ne.s32.totalorder %s77, %s78
      %p89 = scmp.eq.s32.totalorder %s27, 0
      %p90 = por %p88, %p89
      %p91 = scmp.ne.s32.totalorder %s77, %s78
      %p92 = scmp.eq.s32.totalorder %s28, 1
      %p93 = por %p91, %p92
      %p95 = scmp.ne.s32.totalorder %s78, %s94
      %p96 = scmp.eq.s32.totalorder %s28, 0
      %p97 = por %p95, %p96
      %s98 = ssub.s32 %s29, %s41
      %s99 = ssub.s32 %s30, %s37
      %s100 = sor.u32 %s98, %s99
      %p101 = scmp.eq.s32.totalorder %s100, 0
      %s103 = sadd.s32 %s102, 1
      %s104 = scalar_select %p101, %s102, %s103
      %p107 = pneg %p101
      %p108 = scmp.eq.s32.totalorder %s22, 1
      %p109 = por %p107, %p108
      %p110 = scmp.ne.s32.totalorder %s102, %s105
      %p111 = scmp.eq.s32.totalorder %s22, 0
      %p112 = por %p110, %p111
      %p113 = scmp.ne.s32.totalorder %s102, %s105
      %p114 = scmp.eq.s32.totalorder %s27, 1
      %p115 = por %p113, %p114
      %p116 = scmp.ne.s32.totalorder %s105, %s106
      %p117 = scmp.eq.s32.totalorder %s27, 0
      %p118 = por %p116, %p117
      %p119 = scmp.ne.s32.totalorder %s105, %s106
      %p120 = scmp.eq.s32.totalorder %s28, 1
      %p121 = por %p119, %p120
      %p123 = scmp.ne.s32.totalorder %s106, %s122
      %p124 = scmp.eq.s32.totalorder %s28, 0
      %p125 = por %p123, %p124
      %s126 = ssub.s32 %s29, %s41
      %s127 = ssub.s32 %s30, %s37
      %s128 = sor.u32 %s126, %s127
      %p129 = scmp.eq.s32.totalorder %s128, 0
      %s131 = sadd.s32 %s130, 1
      %s132 = scalar_select %p129, %s130, %s131
      %p135 = pneg %p129
      %p136 = scmp.eq.s32.totalorder %s22, 1
      %p137 = por %p135, %p136
      %p138 = scmp.ne.s32.totalorder %s130, %s133
      %p139 = scmp.eq.s32.totalorder %s22, 0
      %p140 = por %p138, %p139
      %p141 = scmp.ne.s32.totalorder %s130, %s133
      %p142 = scmp.eq.s32.totalorder %s27, 1
      %p143 = por %p141, %p142
      %p144 = scmp.ne.s32.totalorder %s133, %s134
      %p145 = scmp.eq.s32.totalorder %s27, 0
      %p146 = por %p144, %p145
      %p147 = scmp.ne.s32.totalorder %s133, %s134
      %p148 = scmp.eq.s32.totalorder %s28, 1
      %p149 = por %p147, %p148
      %p151 = scmp.ne.s32.totalorder %s134, %s150
      %p152 = scmp.eq.s32.totalorder %s28, 0
      %p153 = por %p151, %p152
      %s155 = sadd.s32 %s154, 1
      %p158 = scmp.eq.s32.totalorder %s22, 1
      %p159 = scmp.ne.s32.totalorder %s154, %s156
      %p160 = scmp.eq.s32.totalorder %s22, 0
      %p161 = por %p159, %p160
      %p162 = scmp.ne.s32.totalorder %s154, %s156
      %p163 = scmp.eq.s32.totalorder %s27, 1
      %p164 = por %p162, %p163
      %p165 = scmp.ne.s32.totalorder %s156, %s157
      %p166 = scmp.eq.s32.totalorder %s27, 0
      %p167 = por %p165, %p166
      %p168 = scmp.ne.s32.totalorder %s156, %s157
      %p169 = scmp.eq.s32.totalorder %s28, 1
      %p170 = por %p168, %p169
      %p172 = scmp.ne.s32.totalorder %s157, %s171
      %p173 = scmp.eq.s32.totalorder %s28, 0
      %p174 = por %p172, %p173
      %s176 = sadd.s32 %s175, 1
      %p179 = scmp.eq.s32.totalorder %s22, 1
      %p180 = scmp.ne.s32.totalorder %s175, %s177
      %p181 = scmp.eq.s32.totalorder %s22, 0
      %p182 = por %p180, %p181
      %p183 = scmp.ne.s32.totalorder %s175, %s177
      %p184 = scmp.eq.s32.totalorder %s27, 1
      %p185 = por %p183, %p184
      %p186 = scmp.ne.s32.totalorder %s177, %s178
      %p187 = scmp.eq.s32.totalorder %s27, 0
      %p188 = por %p186, %p187
      %p189 = scmp.ne.s32.totalorder %s177, %s178
      %p190 = scmp.eq.s32.totalorder %s28, 1
      %p191 = por %p189, %p190
      %p193 = scmp.ne.s32.totalorder %s178, %s192
      %p194 = scmp.eq.s32.totalorder %s28, 0
      %p195 = por %p193, %p194
      %s197 = sadd.s32 %s196, 1
      %p200 = scmp.eq.s32.totalorder %s22, 1
      %p201 = scmp.ne.s32.totalorder %s196, %s198
      %p202 = scmp.eq.s32.totalorder %s22, 0
      %p203 = por %p201, %p202
      %p204 = scmp.ne.s32.totalorder %s196, %s198
      %p205 = scmp.eq.s32.totalorder %s27, 1
      %p206 = por %p204, %p205
      %p207 = scmp.ne.s32.totalorder %s198, %s199
      %p208 = scmp.eq.s32.totalorder %s27, 0
      %p209 = por %p207, %p208
      %p210 = scmp.ne.s32.totalorder %s198, %s199
      %p211 = scmp.eq.s32.totalorder %s28, 1
      %p212 = por %p210, %p211
      %p214 = scmp.ne.s32.totalorder %s199, %s213
      %p215 = scmp.eq.s32.totalorder %s28, 0
      %p216 = por %p214, %p215
      %s218 = sadd.s32 %s217, 1
      %p221 = scmp.eq.s32.totalorder %s22, 1
      %p222 = scmp.ne.s32.totalorder %s217, %s219
      %p223 = scmp.eq.s32.totalorder %s22, 0
      %p224 = por %p222, %p223
      %p225 = scmp.ne.s32.totalorder %s217, %s219
      %p226 = scmp.eq.s32.totalorder %s27, 1
      %p227 = por %p225, %p226
      %p228 = scmp.ne.s32.totalorder %s219, %s220
      %p229 = scmp.eq.s32.totalorder %s27, 0
      %p230 = por %p228, %p229
      %p231 = scmp.ne.s32.totalorder %s219, %s220
      %p232 = scmp.eq.s32.totalorder %s28, 1
      %p233 = por %p231, %p232
      %p235 = scmp.ne.s32.totalorder %s220, %s234
      %p236 = scmp.eq.s32.totalorder %s28, 0
      %p237 = por %p235, %p236
      %s238 = ssub.s32 %s29, %s41
      %p239 = scmp.eq.s32.totalorder %s238, 0
      %s241 = sadd.s32 %s240, 1
      %s242 = scalar_select %p239, %s240, %s241
      %p245 = pneg %p239
      %p246 = scmp.eq.s32.totalorder %s22, 1
      %p247 = por %p245, %p246
      %p248 = scmp.ne.s32.totalorder %s240, %s243
      %p249 = scmp.eq.s32.totalorder %s22, 0
      %p250 = por %p248, %p249
      %p251 = scmp.ne.s32.totalorder %s240, %s243
      %p252 = scmp.eq.s32.totalorder %s27, 1
      %p253 = por %p251, %p252
      %p254 = scmp.ne.s32.totalorder %s243, %s244
      %p255 = scmp.eq.s32.totalorder %s27, 0
      %p256 = por %p254, %p255
      %p257 = scmp.ne.s32.totalorder %s243, %s244
      %p258 = scmp.eq.s32.totalorder %s28, 1
      %p259 = por %p257, %p258
      %p261 = scmp.ne.s32.totalorder %s244, %s260
      %p262 = scmp.eq.s32.totalorder %s28, 0
      %p263 = por %p261, %p262
      %s264 = ssub.s32 %s29, %s41
      %p265 = scmp.eq.s32.totalorder %s264, 0
      %s267 = sadd.s32 %s266, 1
      %s268 = scalar_select %p265, %s266, %s267
      %p271 = pneg %p265
      %p272 = scmp.eq.s32.totalorder %s22, 1
      %p273 = por %p271, %p272
      %p274 = scmp.ne.s32.totalorder %s266, %s269
      %p275 = scmp.eq.s32.totalorder %s22, 0
      %p276 = por %p274, %p275
      %p277 = scmp.ne.s32.totalorder %s266, %s269
      %p278 = scmp.eq.s32.totalorder %s27, 1
      %p279 = por %p277, %p278
      %p280 = scmp.ne.s32.totalorder %s269, %s270
      %p281 = scmp.eq.s32.totalorder %s27, 0
      %p282 = por %p280, %p281
      %p283 = scmp.ne.s32.totalorder %s269, %s270
      %p284 = scmp.eq.s32.totalorder %s28, 1
      %p285 = por %p283, %p284
      %p287 = scmp.ne.s32.totalorder %s270, %s286
      %p288 = scmp.eq.s32.totalorder %s28, 0
      %p289 = por %p287, %p288
      %p290 = scmp.le.s32.totalorder 1, %s22
      %p291 = scmp.lt.s32.totalorder %s22, 3
      %p292 = pnand %p290, %p291
      %p293 = pneg %p292
      // Predicated region
      $region9: #{tpu_custom_call.1} parent=5 // pred_check
        _
      $region10: #{tpu_custom_call.1} parent=5 // pred_check_branch
        %295 = sbr.rel (%p292) target = $region12
      $region11: #{tpu_custom_call.1} parent=5 // pred_region
        %s296 = ssub.s32 %s22, 1
        // Predicated region
        $region13: #{tpu_custom_call.1} parent=11 // pred_check
          %p297 = pneg %p167
        $region14: #{tpu_custom_call.1} parent=11 // pred_check_branch
          %299 = sbr.rel (%p297) target = $region16
        $region15: #{tpu_custom_call.1} parent=11 // pred_region
          _
        $region16: #{tpu_custom_call.1} parent=11 // pred_fallthru
          _
        // Predicated region
        $region17: #{tpu_custom_call.1} parent=11 // pred_check
          %p300 = pneg %p188
        $region18: #{tpu_custom_call.1} parent=11 // pred_check_branch
          %302 = sbr.rel (%p300) target = $region20
        $region19: #{tpu_custom_call.1} parent=11 // pred_region
          _
        $region20: #{tpu_custom_call.1} parent=11 // pred_fallthru
          _
        // Predicated region
        $region21: #{tpu_custom_call.1} parent=11 // pred_check
          %p303 = pneg %p209
        $region22: #{tpu_custom_call.1} parent=11 // pred_check_branch
          %305 = sbr.rel (%p303) target = $region24
        $region23: #{tpu_custom_call.1} parent=11 // pred_region
          _
        $region24: #{tpu_custom_call.1} parent=11 // pred_fallthru
          _
        // Predicated region
        $region25: #{tpu_custom_call.1} parent=11 // pred_check
          %p306 = pneg %p230
        $region26: #{tpu_custom_call.1} parent=11 // pred_check_branch
          %308 = sbr.rel (%p306) target = $region28
        $region27: #{tpu_custom_call.1} parent=11 // pred_region
          _
        $region28: #{tpu_custom_call.1} parent=11 // pred_fallthru
          _
      $region12: #{tpu_custom_call.1} parent=5 // pred_fallthru
        _
      %p309 = scmp.lt.s32.totalorder %s22, 2
      // Predicated region
      $region29: #{tpu_custom_call.1} parent=5 // pred_check
        %p310 = pneg %p309
      $region30: #{tpu_custom_call.1} parent=5 // pred_check_branch
        %312 = sbr.rel (%p310) target = $region32
      $region31: #{tpu_custom_call.1} parent=5 // pred_region
        // Predicated region
        $region33: #{tpu_custom_call.1} parent=31 // pred_check
          %p313 = pneg %p56
        $region34: #{tpu_custom_call.1} parent=31 // pred_check_branch
          %315 = sbr.rel (%p313) target = $region36
        $region35: #{tpu_custom_call.1} parent=31 // pred_region
          %s316 = smul.u32 2, %s30
          %p317 = scmp.lt.s32.totalorder %s29, 1
          %s318 = scalar_select %p317, %s29, 1
          %p319 = scmp.lt.s32.totalorder %s316, 1
          %s320 = scalar_select %p319, %s316, 1
          %s321 = smul.addr %s318, 2
          %s322 = sadd.s32 %s320, %s321
          %s323 = smul.addr %s322, 8
          %s324 = scalar_lea.vmem %s0, %s323
          %s325 = smul.u32 2, %s30
        $region36: #{tpu_custom_call.1} parent=31 // pred_fallthru
          _
        // Predicated region
        $region37: #{tpu_custom_call.1} parent=31 // pred_check
          %p326 = pneg %p84
        $region38: #{tpu_custom_call.1} parent=31 // pred_check_branch
          %328 = sbr.rel (%p326) target = $region40
        $region39: #{tpu_custom_call.1} parent=31 // pred_region
          %s329 = sand.u32 %s74, 1
          %s330 = scalar_lea.sflag [#allocation7], %s329
          %s331 = sand.u32 %s74, 1
          %s332 = smul.addr %s331, 16
          %s333 = scalar_lea.vmem [#allocation6], %s332
          %s334 = smul.u32 2, %s30
          %s336 = ssub.s32 256, 256
          %337 = vsyncadd %s330, %s336
          %s338 = smul.addr %s29, 2
          %s339 = sadd.s32 %s334, %s338
          %s340 = smul.addr %s339, 128
          %s341 = scalar_lea.hbm %s1, %s340
          %s343 = sshll.u32 %s333, 4
          %s344 = int_to_ptr.vmem [resolvable:$true] %s343
          %346 = dma.hbm_to_vmem [thread:$0]  %s341, 256, %s344, %s330
        $region40: #{tpu_custom_call.1} parent=31 // pred_fallthru
          _
        // Predicated region
        $region41: #{tpu_custom_call.1} parent=31 // pred_check
          %p347 = pneg %p112
        $region42: #{tpu_custom_call.1} parent=31 // pred_check_branch
          %349 = sbr.rel (%p347) target = $region44
        $region43: #{tpu_custom_call.1} parent=31 // pred_region
          %s350 = sand.u32 %s22, 1
          %s351 = scalar_lea.sflag [#allocation9], %s350
          %s352 = sand.u32 %s102, 1
          %s353 = smul.addr %s352, 16
          %s354 = scalar_lea.vmem [#allocation8], %s353
          %s355 = smul.u32 2, %s30
          %s357 = ssub.s32 256, 256
          %358 = vsyncadd %s351, %s357
          %s359 = smul.addr %s29, 2
          %s360 = sadd.s32 %s355, %s359
          %s361 = smul.addr %s360, 128
          %s362 = scalar_lea.hbm %s2, %s361
          %s364 = sshll.u32 %s354, 4
          %s365 = int_to_ptr.vmem [resolvable:$true] %s364
          %367 = dma.hbm_to_vmem [thread:$0]  %s362, 256, %s365, %s351
        $region44: #{tpu_custom_call.1} parent=31 // pred_fallthru
          _
        // Predicated region
        $region45: #{tpu_custom_call.1} parent=31 // pred_check
          %p368 = pneg %p140
        $region46: #{tpu_custom_call.1} parent=31 // pred_check_branch
          %370 = sbr.rel (%p368) target = $region48
        $region47: #{tpu_custom_call.1} parent=31 // pred_region
          %s371 = sand.u32 %s22, 1
          %s372 = scalar_lea.sflag [#allocation9], %s371
          %s373 = sand.u32 %s130, 1
          %s374 = smul.addr %s373, 16
          %s375 = scalar_lea.vmem [#allocation10], %s374
          %s376 = smul.u32 2, %s30
          %s378 = ssub.s32 256, 256
          %379 = vsyncadd %s372, %s378
          %s380 = smul.addr %s29, 2
          %s381 = sadd.s32 %s376, %s380
          %s382 = smul.addr %s381, 128
          %s383 = scalar_lea.hbm %s3, %s382
          %s385 = sshll.u32 %s375, 4
          %s386 = int_to_ptr.vmem [resolvable:$true] %s385
          %388 = dma.hbm_to_vmem [thread:$0]  %s383, 256, %s386, %s372
        $region48: #{tpu_custom_call.1} parent=31 // pred_fallthru
          _
      $region32: #{tpu_custom_call.1} parent=5 // pred_fallthru
        _
      %p389 = scmp.le.s32.totalorder 1, %s22
      %p390 = scmp.lt.s32.totalorder %s22, 3
      %p391 = pnand %p389, %p390
      %p392 = pneg %p391
      // Predicated region
      $region49: #{tpu_custom_call.1} parent=5 // pred_check
        _
      $region50: #{tpu_custom_call.1} parent=5 // pred_check_branch
        %394 = sbr.rel (%p391) target = $region52
      $region51: #{tpu_custom_call.1} parent=5 // pred_region
        %s395 = ssub.s32 %s22, 1
        %s396 = sand.u32 %s77, 1
        %s397 = scalar_lea.sflag [#allocation7], %s396
        %s398 = sand.u32 %s77, 1
        %s399 = smul.addr %s398, 16
        %s400 = scalar_lea.vmem [#allocation6], %s399
        // Predicated region
        $region53: #{tpu_custom_call.1} parent=51 // pred_check
          %p401 = pneg %p90
        $region54: #{tpu_custom_call.1} parent=51 // pred_check_branch
          %403 = sbr.rel (%p401) target = $region56
        $region55: #{tpu_custom_call.1} parent=51 // pred_region
          %404 = dma.done %s397, 256
        $region56: #{tpu_custom_call.1} parent=51 // pred_fallthru
          _
        %s405 = sand.u32 %s27, 1
        %s406 = scalar_lea.sflag [#allocation9], %s405
        %s407 = sand.u32 %s105, 1
        %s408 = smul.addr %s407, 16
        %s409 = scalar_lea.vmem [#allocation8], %s408
        // Predicated region
        $region57: #{tpu_custom_call.1} parent=51 // pred_check
          %p410 = pneg %p118
        $region58: #{tpu_custom_call.1} parent=51 // pred_check_branch
          %412 = sbr.rel (%p410) target = $region60
        $region59: #{tpu_custom_call.1} parent=51 // pred_region
          %413 = dma.done %s406, 256
        $region60: #{tpu_custom_call.1} parent=51 // pred_fallthru
          _
        %s414 = sand.u32 %s27, 1
        %s415 = scalar_lea.sflag [#allocation9], %s414
        %s416 = sand.u32 %s133, 1
        %s417 = smul.addr %s416, 16
        %s418 = scalar_lea.vmem [#allocation10], %s417
        // Predicated region
        $region61: #{tpu_custom_call.1} parent=51 // pred_check
          %p419 = pneg %p146
        $region62: #{tpu_custom_call.1} parent=51 // pred_check_branch
          %421 = sbr.rel (%p419) target = $region64
        $region63: #{tpu_custom_call.1} parent=51 // pred_region
          %422 = dma.done %s415, 256
        $region64: #{tpu_custom_call.1} parent=51 // pred_fallthru
          _
        %s423 = smul.u32 2, %s32
        %p424 = scmp.lt.s32.totalorder %s31, 1
        %s425 = scalar_select %p424, %s31, 1
        %p426 = scmp.lt.s32.totalorder %s423, 1
        %s427 = scalar_select %p426, %s423, 1
        %s428 = smul.addr %s425, 2
        %s429 = sadd.s32 %s427, %s428
        %s430 = smul.addr %s429, 8
        %s431 = scalar_lea.vmem %s0, %s430
        %p432 = pneg %p62
        %p433 = pneg %p59
        %s434 = sand.u32 %s77, 1
        %s435 = scalar_lea.sflag [#allocation7], %s434
        %s436 = sand.u32 %s77, 1
        %s437 = smul.addr %s436, 16
        %s438 = scalar_lea.vmem [#allocation6], %s437
        %p439 = pneg %p90
        %p440 = pneg %p87
        %s441 = sand.u32 %s27, 1
        %s442 = scalar_lea.sflag [#allocation9], %s441
        %s443 = sand.u32 %s105, 1
        %s444 = smul.addr %s443, 16
        %s445 = scalar_lea.vmem [#allocation8], %s444
        %p446 = pneg %p118
        %p447 = pneg %p115
        %s448 = sand.u32 %s27, 1
        %s449 = scalar_lea.sflag [#allocation9], %s448
        %s450 = sand.u32 %s133, 1
        %s451 = smul.addr %s450, 16
        %s452 = scalar_lea.vmem [#allocation10], %s451
        %p453 = pneg %p146
        %p454 = pneg %p143
        %p455 = pneg %p167
        %p456 = pneg %p164
        %p457 = pneg %p188
        %p458 = pneg %p185
        %p459 = pneg %p209
        %p460 = pneg %p206
        %p461 = pneg %p230
        %p462 = pneg %p227
        %p463 = pneg %p256
        %p464 = pneg %p253
        %p465 = scmp.lt.s32.totalorder %s31, 1
        %s466 = scalar_select %p465, %s31, 1
        %s467 = smul.addr %s466, 4
        %s468 = smul.addr %s467, 8
        %s469 = scalar_lea.vmem %s8, %s468
        %p470 = pneg %p282
        %p471 = pneg %p279
        %p472 = scmp.lt.s32.totalorder %s31, 1
        %s473 = scalar_select %p472, %s31, 1
        %s474 = smul.addr %s473, 8
        %s475 = scalar_lea.vmem %s9, %s474
        %s476 = smul.u32 2, %s32
        %p477 = scmp.lt.s32.totalorder %s31, 1
        %s478 = scalar_select %p477, %s31, 1
        %p479 = scmp.lt.s32.totalorder %s476, 1
        %s480 = scalar_select %p479, %s476, 1
        %s481 = smul.addr %s478, 2
        %s482 = sadd.s32 %s480, %s481
        %s483 = smul.addr %s482, 8
        %s484 = scalar_lea.vmem %s0, %s483
        %s485 = smul.u32 2, %s32
        %s486 = smul.u32 2, %s32
        %s487 = smul.u32 2, %s32
        %s488 = smul.u32 2, %s32
        %p489 = scmp.lt.s32.totalorder %s31, 1
        %s490 = scalar_select %p489, %s31, 1
        %s491 = smul.addr %s490, 4
        %s492 = smul.addr %s491, 8
        %s493 = scalar_lea.vmem %s8, %s492
        %p494 = scmp.lt.s32.totalorder %s31, 1
        %s495 = scalar_select %p494, %s31, 1
        %s496 = smul.addr %s495, 8
        %s497 = scalar_lea.vmem %s9, %s496
        %p498 = scmp.eq.s32.totalorder %s32, 0
        // Predicated region
        $region65: #{tpu_custom_call.1} parent=51 // pred_check
          %p499 = pneg %p498
        $region66: #{tpu_custom_call.1} parent=51 // pred_check_branch
          %501 = sbr.rel (%p499) target = $region68
        $region67: #{tpu_custom_call.1} parent=51 // pred_region
          %vm502 = vcmask 7168
          %503 = vst.msk [vmem:[#allocation2] sm:$0xff] %vm502, 0.0
          %504 = vst.msk [vmem:[#allocation2 + $0x8] sm:$0xff] %vm502, 0.0
          %505 = vst.msk [vmem:[#allocation2 + $0x10] sm:$0xff] %vm502, 0.0
          %506 = vst.msk [vmem:[#allocation2 + $0x18] sm:$0xff] %vm502, 0.0
          %507 = vst.msk [vmem:[#allocation4] sm:$0xff] %vm502, 0.0
          %508 = vst.msk [vmem:[#allocation3] sm:$0xff] %vm502, -inf
          %509 = vst.msk [vmem:[#allocation3 + $0x8] sm:$0xff] %vm502, -inf
          %510 = vst.msk [vmem:[#allocation3 + $0x10] sm:$0xff] %vm502, -inf
          %511 = vst.msk [vmem:[#allocation3 + $0x18] sm:$0xff] %vm502, -inf
          %512 = vst.msk [vmem:[#allocation5] sm:$0xff] %vm502, -inf
        $region68: #{tpu_custom_call.1} parent=51 // pred_fallthru
          _
        %v513 = vld [vmem:[%s484] sm:$0xff]
        %v514 = vld [vmem:[%s484 + $0x8] sm:$0xff]
        %v515 = vld [vmem:[%s400] sm:$0xff]
        %v516 = vld [vmem:[%s400 + $0x8] sm:$0xff]
        %v517 = vld [vmem:[%s409] sm:$0xff]
        %v518 = vld [vmem:[%s409 + $0x8] sm:$0xff]
        %v519 = vld [vmem:[%s418] sm:$0xff]
        %v520 = vld [vmem:[%s418 + $0x8] sm:$0xff]
        %v521 = vadd.f32 %v513, %v515
        %v522 = vadd.f32 %v514, %v516
        %v523 = vadd.f32 %v521, %v517
        %v524 = vadd.f32 %v522, %v518
        %v525 = vadd.f32 %v523, %v519
        %v526 = vadd.f32 %v524, %v520
        %v527 = vld [vmem:[#allocation2] sm:$0xff]
        %v528 = vld [vmem:[#allocation2 + $0x8] sm:$0xff]
        %v529 = vld [vmem:[#allocation2 + $0x10] sm:$0xff]
        %v530 = vld [vmem:[#allocation2 + $0x18] sm:$0xff]
        %v531 = vadd.f32 %v513, %v514
        %532 = vadd.xlane.f32.xlu0 %v531
        %v533 = vpop.xlane.xlu0 %532
        %v534 = vadd.f32 %v515, %v516
        %535 = vadd.xlane.f32.xlu0 %v534
        %v536 = vpop.xlane.xlu0 %535
        %v537 = vadd.f32 %v517, %v518
        %538 = vadd.xlane.f32.xlu0 %v537
        %v539 = vpop.xlane.xlu0 %538
        %v540 = vadd.f32 %v519, %v520
        %541 = vadd.xlane.f32.xlu0 %v540
        %v542 = vpop.xlane.xlu0 %541
        %v543 = vadd.f32 %v527, %v533
        %v544 = vadd.f32 %v528, %v536
        %v545 = vadd.f32 %v529, %v539
        %v546 = vadd.f32 %v530, %v542
        %vm547 = vcmask 7168
        %548 = vst.msk [vmem:[#allocation2] sm:$0xff] %vm547, %v543
        %549 = vst.msk [vmem:[#allocation2 + $0x8] sm:$0xff] %vm547, %v544
        %550 = vst.msk [vmem:[#allocation2 + $0x10] sm:$0xff] %vm547, %v545
        %551 = vst.msk [vmem:[#allocation2 + $0x18] sm:$0xff] %vm547, %v546
        %v552 = vld [vmem:[#allocation3] sm:$0xff]
        %v553 = vld [vmem:[#allocation3 + $0x8] sm:$0xff]
        %v554 = vld [vmem:[#allocation3 + $0x10] sm:$0xff]
        %v555 = vld [vmem:[#allocation3 + $0x18] sm:$0xff]
        %v556 = vmax.f32 %v513, %v514
        %557 = vmax.xlane.f32.xlu0 %v556
        %v558 = vpop.xlane.xlu0 %557
        %v559 = vmax.f32 %v515, %v516
        %560 = vmax.xlane.f32.xlu0 %v559
        %v561 = vpop.xlane.xlu0 %560
        %v562 = vmax.f32 %v517, %v518
        %563 = vmax.xlane.f32.xlu0 %v562
        %v564 = vpop.xlane.xlu0 %563
        %v565 = vmax.f32 %v519, %v520
        %566 = vmax.xlane.f32.xlu0 %v565
        %v567 = vpop.xlane.xlu0 %566
        %v568 = vmax.f32 %v552, %v558
        %v569 = vmax.f32 %v553, %v561
        %v570 = vmax.f32 %v554, %v564
        %v571 = vmax.f32 %v555, %v567
        %572 = vst.msk [vmem:[#allocation3] sm:$0xff] %vm547, %v568
        %573 = vst.msk [vmem:[#allocation3 + $0x8] sm:$0xff] %vm547, %v569
        %574 = vst.msk [vmem:[#allocation3 + $0x10] sm:$0xff] %vm547, %v570
        %575 = vst.msk [vmem:[#allocation3 + $0x18] sm:$0xff] %vm547, %v571
        %v576 = vld [vmem:[#allocation4] sm:$0xff]
        %v577 = vadd.f32 %v525, %v526
        %578 = vadd.xlane.f32.xlu0 %v577
        %v579 = vpop.xlane.xlu0 %578
        %v580 = vadd.f32 %v576, %v579
        %581 = vst.msk [vmem:[#allocation4] sm:$0xff] %vm547, %v580
        %v582 = vld [vmem:[#allocation5] sm:$0xff]
        %v583 = vmax.f32 %v525, %v526
        %584 = vmax.xlane.f32.xlu0 %v583
        %v585 = vpop.xlane.xlu0 %584
        %v586 = vmax.f32 %v582, %v585
        %587 = vst.msk [vmem:[#allocation5] sm:$0xff] %vm547, %v586
        // Predicated region
        $region69: #{tpu_custom_call.1} parent=51 // pred_check
          %p588 = pneg %p498
        $region70: #{tpu_custom_call.1} parent=51 // pred_check_branch
          %590 = sbr.rel (%p588) target = $region72
        $region71: #{tpu_custom_call.1} parent=51 // pred_region
          %v591 = vld [vmem:[#allocation2] sm:$0xff]
          %v592 = vld [vmem:[#allocation2 + $0x8] sm:$0xff]
          %v593 = vld [vmem:[#allocation2 + $0x10] sm:$0xff]
          %v594 = vld [vmem:[#allocation2 + $0x18] sm:$0xff]
          %v595 = vmul.f32 %v591, 0.00390625
          %v596 = vmul.f32 %v592, 0.00390625
          %v597 = vmul.f32 %v593, 0.00390625
          %v598 = vmul.f32 %v594, 0.00390625
          %v599 = vld [vmem:[#allocation3] sm:$0xff]
          %v600 = vld [vmem:[#allocation3 + $0x8] sm:$0xff]
          %v601 = vld [vmem:[#allocation3 + $0x10] sm:$0xff]
          %v602 = vld [vmem:[#allocation3 + $0x18] sm:$0xff]
          %v603 = vld [vmem:[%s4] sm:$0x3]
          %v604 = vld [vmem:[%s5] sm:$0xff]
          %v605 = vld [vmem:[%s5 + $0x8] sm:$0xff]
          %v606 = vld [vmem:[%s5 + $0x10] sm:$0xff]
          %v607 = vld [vmem:[%s5 + $0x18] sm:$0xff]
          %612 = vrot.lane.b32.xlu0 %v599, 1
          %v613 = vpop.permute.xlu0 %612
          %614 = vrot.lane.b32.xlu0 %v600, 1
          %v615 = vpop.permute.xlu0 %614
          %616 = vrot.lane.b32.xlu0 %v601, 1
          %v617 = vpop.permute.xlu0 %616
          %618 = vrot.lane.b32.xlu0 %v602, 1
          %v619 = vpop.permute.xlu0 %618
          %v624 = vsel %vm547, %v595, %v613
          %v625 = vsel %vm547, %v596, %v615
          %v626 = vsel %vm547, %v597, %v617
          %v627 = vsel %vm547, %v598, %v619
          %vm628 = vcmask 261120
          %v630 = vsel %vm628, %v603, 0
          %632 = vmatprep.subr.mxu0 0.0
          %633 = vmatpush1.msra.mxu0 %v624
          %634 = vmatprep.subr.mxu0 0.0
          %635 = vmatpush1.msra.mxu0 %v625
          %636 = vmatprep.subr.mxu0 0.0
          %637 = vmatpush1.msra.mxu0 %v626
          %638 = vmatprep.subr.mxu0 0.0
          %639 = vmatpush1.msra.mxu0 %v627
          %640 = vmatprep.subr.mxu0 0.0
          %641 = vmatpush1.msra.mxu0 0.0
          %642 = vmatprep.subr.mxu0 0.0
          %643 = vmatpush1.msra.mxu0 0.0
          %644 = vmatprep.subr.mxu0 0.0
          %645 = vmatpush1.msra.mxu0 0.0
          %646 = vmatprep.subr.mxu0 0.0
          %647 = vmatpush1.msra.mxu0 0.0
          %648 = vmatprep.subr.mxu0 0.0
          %649 = vmatpush1.msra.mxu0 0.0
          %650 = vmatprep.subr.mxu0 0.0
          %651 = vmatpush1.msra.mxu0 0.0
          %652 = vmatprep.subr.mxu0 0.0
          %653 = vmatpush1.msra.mxu0 0.0
          %654 = vmatprep.subr.mxu0 0.0
          %655 = vmatpush1.msra.mxu0 0.0
          %656 = vmatprep.subr.mxu0 0.0
          %657 = vmatpush1.msra.mxu0 0.0
          %658 = vmatprep.subr.mxu0 0.0
          %659 = vmatpush1.msra.mxu0 0.0
          %660 = vmatprep.subr.mxu0 0.0
          %661 = vmatpush1.msra.mxu0 0.0
          %662 = vmatprep.subr.mxu0 0.0
          %663 = vmatpush1.msra.mxu0 0.0
          %664 = vmatprep.subr.mxu0 0.0
          %665 = vmatpush1.msra.mxu0 0.0
          %666 = vmatprep.subr.mxu0 0.0
          %667 = vmatpush1.msra.mxu0 0.0
          %668 = vmatprep.subr.mxu0 0.0
          %669 = vmatpush1.msra.mxu0 0.0
          %670 = vmatprep.subr.mxu0 0.0
          %671 = vmatpush1.msra.mxu0 0.0
          %672 = vmatprep.subr.mxu0 0.0
          %673 = vmatpush1.msra.mxu0 0.0
          %674 = vmatprep.subr.mxu0 0.0
          %675 = vmatpush1.msra.mxu0 0.0
          %676 = vmatprep.subr.mxu0 0.0
          %677 = vmatpush1.msra.mxu0 0.0
          %678 = vmatprep.subr.mxu0 0.0
          %679 = vmatpush1.msra.mxu0 0.0
          %680 = vmatprep.subr.mxu0 0.0
          %681 = vmatpush1.msra.mxu0 0.0
          %682 = vmatprep.subr.mxu0 0.0
          %683 = vmatpush1.msra.mxu0 0.0
          %684 = vmatprep.subr.mxu0 0.0
          %685 = vmatpush1.msra.mxu0 0.0
          %686 = vmatprep.subr.mxu0 0.0
          %687 = vmatpush1.msra.mxu0 0.0
          %688 = vmatprep.subr.mxu0 0.0
          %689 = vmatpush1.msra.mxu0 0.0
          %690 = vmatprep.subr.mxu0 0.0
          %691 = vmatpush1.msra.mxu0 0.0
          %692 = vmatprep.subr.mxu0 0.0
          %693 = vmatpush1.msra.mxu0 0.0
          %694 = vmatprep.subr.mxu0 0.0
          %695 = vmatpush1.msra.mxu0 0.0
          %696 = vmatprep.mubr.f32.mxu0 0.0
          %697 = vmatmul.mubr.f32.gmra.mrb[0].mxu0 %v630
          %v698 = vpop.f32.mrb[0].mxu0
          %v699 = vadd.f32 0.0, %v698
          %v700 = vpop.f32.mrb[0].mxu0
          %701 = vdwg.mxu0
          %v702 = vmax.f32 %v699, 0.0
          %vm703 = vcmask 15360
          %v705 = vsel %vm703, %v604, 0
          %v708 = vsel %vm703, %v605, 0
          %v711 = vsel %vm703, %v606, 0
          %v714 = vsel %vm703, %v607, 0
          %vm716 = vcmask 1041408
          %v718 = vsel %vm716, %v702, 0
          %720 = vmatprep.subr.mxu0 0.0
          %721 = vmatpush1.msra.mxu0 %v718
          %722 = vmatprep.subr.mxu0 0.0
          %723 = vmatpush1.msra.mxu0 0.0
          %724 = vmatprep.subr.mxu0 0.0
          %725 = vmatpush1.msra.mxu0 0.0
          %726 = vmatprep.subr.mxu0 0.0
          %727 = vmatpush1.msra.mxu0 0.0
          %728 = vmatprep.subr.mxu0 0.0
          %729 = vmatpush1.msra.mxu0 0.0
          %730 = vmatprep.subr.mxu0 0.0
          %731 = vmatpush1.msra.mxu0 0.0
          %732 = vmatprep.subr.mxu0 0.0
          %733 = vmatpush1.msra.mxu0 0.0
          %734 = vmatprep.subr.mxu0 0.0
          %735 = vmatpush1.msra.mxu0 0.0
          %736 = vmatprep.subr.mxu0 0.0
          %737 = vmatpush1.msra.mxu0 0.0
          %738 = vmatprep.subr.mxu0 0.0
          %739 = vmatpush1.msra.mxu0 0.0
          %740 = vmatprep.subr.mxu0 0.0
          %741 = vmatpush1.msra.mxu0 0.0
          %742 = vmatprep.subr.mxu0 0.0
          %743 = vmatpush1.msra.mxu0 0.0
          %744 = vmatprep.subr.mxu0 0.0
          %745 = vmatpush1.msra.mxu0 0.0
          %746 = vmatprep.subr.mxu0 0.0
          %747 = vmatpush1.msra.mxu0 0.0
          %748 = vmatprep.subr.mxu0 0.0
          %749 = vmatpush1.msra.mxu0 0.0
          %750 = vmatprep.subr.mxu0 0.0
          %751 = vmatpush1.msra.mxu0 0.0
          %752 = vmatprep.subr.mxu0 0.0
          %753 = vmatpush1.msra.mxu0 0.0
          %754 = vmatprep.subr.mxu0 0.0
          %755 = vmatpush1.msra.mxu0 0.0
          %756 = vmatprep.subr.mxu0 0.0
          %757 = vmatpush1.msra.mxu0 0.0
          %758 = vmatprep.subr.mxu0 0.0
          %759 = vmatpush1.msra.mxu0 0.0
          %760 = vmatprep.subr.mxu0 0.0
          %761 = vmatpush1.msra.mxu0 0.0
          %762 = vmatprep.subr.mxu0 0.0
          %763 = vmatpush1.msra.mxu0 0.0
          %764 = vmatprep.subr.mxu0 0.0
          %765 = vmatpush1.msra.mxu0 0.0
          %766 = vmatprep.subr.mxu0 0.0
          %767 = vmatpush1.msra.mxu0 0.0
          %768 = vmatprep.subr.mxu0 0.0
          %769 = vmatpush1.msra.mxu0 0.0
          %770 = vmatprep.subr.mxu0 0.0
          %771 = vmatpush1.msra.mxu0 0.0
          %772 = vmatprep.subr.mxu0 0.0
          %773 = vmatpush1.msra.mxu0 0.0
          %774 = vmatprep.subr.mxu0 0.0
          %775 = vmatpush1.msra.mxu0 0.0
          %776 = vmatprep.subr.mxu0 0.0
          %777 = vmatpush1.msra.mxu0 0.0
          %778 = vmatprep.subr.mxu0 0.0
          %779 = vmatpush1.msra.mxu0 0.0
          %780 = vmatprep.subr.mxu0 0.0
          %781 = vmatpush1.msra.mxu0 0.0
          %782 = vmatprep.subr.mxu0 0.0
          %783 = vmatpush1.msra.mxu0 0.0
          %784 = vmatprep.mubr.f32.mxu0 0.0
          %785 = vmatmul.mubr.f32.gmra.mrb[0].mxu0 %v705
          %v786 = vpop.f32.mrb[0].mxu0
          %v787 = vadd.f32 0.0, %v786
          %v788 = vpop.f32.mrb[0].mxu0
          %789 = vmatprep.mubr.f32.mxu0 0.0
          %790 = vmatmul.mubr.f32.gmra.mrb[0].mxu0 %v708
          %v791 = vpop.f32.mrb[0].mxu0
          %v792 = vadd.f32 0.0, %v791
          %v793 = vpop.f32.mrb[0].mxu0
          %794 = vmatprep.mubr.f32.mxu0 0.0
          %795 = vmatmul.mubr.f32.gmra.mrb[0].mxu0 %v711
          %v796 = vpop.f32.mrb[0].mxu0
          %v797 = vadd.f32 0.0, %v796
          %v798 = vpop.f32.mrb[0].mxu0
          %799 = vmatprep.mubr.f32.mxu0 0.0
          %800 = vmatmul.mubr.f32.gmra.mrb[0].mxu0 %v714
          %v801 = vpop.f32.mrb[0].mxu0
          %v802 = vadd.f32 0.0, %v801
          %v803 = vpop.f32.mrb[0].mxu0
          %804 = vdwg.mxu0
          %809 = vrot.lane.b32.xlu0 %v787, 127
          %v810 = vpop.permute.xlu0 %809
          %811 = vrot.lane.b32.xlu0 %v792, 127
          %v812 = vpop.permute.xlu0 %811
          %813 = vrot.lane.b32.xlu0 %v797, 127
          %v814 = vpop.permute.xlu0 %813
          %815 = vrot.lane.b32.xlu0 %v802, 127
          %v816 = vpop.permute.xlu0 %815
          %v821 = vadd.f32 %v787, %v810
          %v822 = vadd.f32 %v792, %v812
          %v823 = vadd.f32 %v797, %v814
          %v824 = vadd.f32 %v802, %v816
          %v825 = vxor.u32 %v821, 2147483648
          %v826 = vxor.u32 %v822, 2147483648
          %v827 = vxor.u32 %v823, 2147483648
          %v828 = vxor.u32 %v824, 2147483648
          %v829 = vmul.f32 %v825, 1.442695
          %v830 = vpow.pop %v829
          %v831 = vmul.f32 %v826, 1.442695
          %v832 = vpow.pop %v831
          %v833 = vmul.f32 %v827, 1.442695
          %v834 = vpow.pop %v833
          %v835 = vmul.f32 %v828, 1.442695
          %v836 = vpow.pop %v835
          %v837 = vadd.f32 %v830, 1.0
          %v838 = vadd.f32 %v832, 1.0
          %v839 = vadd.f32 %v834, 1.0
          %v840 = vadd.f32 %v836, 1.0
          %v841 = vrcp.pop %v837
          %v842 = vmul.f32 1.0, %v841
          %v843 = vrcp.pop %v838
          %v844 = vmul.f32 1.0, %v843
          %v845 = vrcp.pop %v839
          %v846 = vmul.f32 1.0, %v845
          %v847 = vrcp.pop %v840
          %v848 = vmul.f32 1.0, %v847
          %849 = vst.msk [vmem:[%s493] sm:$0xff] %vm547, %v842
          %850 = vst.msk [vmem:[%s493 + $0x8] sm:$0xff] %vm547, %v844
          %851 = vst.msk [vmem:[%s493 + $0x10] sm:$0xff] %vm547, %v846
          %852 = vst.msk [vmem:[%s493 + $0x18] sm:$0xff] %vm547, %v848
          %v853 = vld [vmem:[#allocation4] sm:$0xff]
          %v854 = vmul.f32 %v853, 0.00390625
          %v855 = vld [vmem:[#allocation5] sm:$0xff]
          %v856 = vld [vmem:[%s6] sm:$0x3]
          %v857 = vld [vmem:[%s7] sm:$0xff]
          %859 = vrot.lane.b32.xlu0 %v855, 1
          %v860 = vpop.permute.xlu0 %859
          %v862 = vsel %vm547, %v854, %v860
          %vm863 = vcmask 64512
          %v865 = vsel %vm863, %v856, 0
          %867 = vmatprep.subr.mxu0 0.0
          %868 = vmatpush1.msra.mxu0 %v862
          %869 = vmatprep.subr.mxu0 0.0
          %870 = vmatpush1.msra.mxu0 0.0
          %871 = vmatprep.subr.mxu0 0.0
          %872 = vmatpush1.msra.mxu0 0.0
          %873 = vmatprep.subr.mxu0 0.0
          %874 = vmatpush1.msra.mxu0 0.0
          %875 = vmatprep.subr.mxu0 0.0
          %876 = vmatpush1.msra.mxu0 0.0
          %877 = vmatprep.subr.mxu0 0.0
          %878 = vmatpush1.msra.mxu0 0.0
          %879 = vmatprep.subr.mxu0 0.0
          %880 = vmatpush1.msra.mxu0 0.0
          %881 = vmatprep.subr.mxu0 0.0
          %882 = vmatpush1.msra.mxu0 0.0
          %883 = vmatprep.subr.mxu0 0.0
          %884 = vmatpush1.msra.mxu0 0.0
          %885 = vmatprep.subr.mxu0 0.0
          %886 = vmatpush1.msra.mxu0 0.0
          %887 = vmatprep.subr.mxu0 0.0
          %888 = vmatpush1.msra.mxu0 0.0
          %889 = vmatprep.subr.mxu0 0.0
          %890 = vmatpush1.msra.mxu0 0.0
          %891 = vmatprep.subr.mxu0 0.0
          %892 = vmatpush1.msra.mxu0 0.0
          %893 = vmatprep.subr.mxu0 0.0
          %894 = vmatpush1.msra.mxu0 0.0
          %895 = vmatprep.subr.mxu0 0.0
          %896 = vmatpush1.msra.mxu0 0.0
          %897 = vmatprep.subr.mxu0 0.0
          %898 = vmatpush1.msra.mxu0 0.0
          %899 = vmatprep.subr.mxu0 0.0
          %900 = vmatpush1.msra.mxu0 0.0
          %901 = vmatprep.subr.mxu0 0.0
          %902 = vmatpush1.msra.mxu0 0.0
          %903 = vmatprep.subr.mxu0 0.0
          %904 = vmatpush1.msra.mxu0 0.0
          %905 = vmatprep.subr.mxu0 0.0
          %906 = vmatpush1.msra.mxu0 0.0
          %907 = vmatprep.subr.mxu0 0.0
          %908 = vmatpush1.msra.mxu0 0.0
          %909 = vmatprep.subr.mxu0 0.0
          %910 = vmatpush1.msra.mxu0 0.0
          %911 = vmatprep.subr.mxu0 0.0
          %912 = vmatpush1.msra.mxu0 0.0
          %913 = vmatprep.subr.mxu0 0.0
          %914 = vmatpush1.msra.mxu0 0.0
          %915 = vmatprep.subr.mxu0 0.0
          %916 = vmatpush1.msra.mxu0 0.0
          %917 = vmatprep.subr.mxu0 0.0
          %918 = vmatpush1.msra.mxu0 0.0
          %919 = vmatprep.subr.mxu0 0.0
          %920 = vmatpush1.msra.mxu0 0.0
          %921 = vmatprep.subr.mxu0 0.0
          %922 = vmatpush1.msra.mxu0 0.0
          %923 = vmatprep.subr.mxu0 0.0
          %924 = vmatpush1.msra.mxu0 0.0
          %925 = vmatprep.subr.mxu0 0.0
          %926 = vmatpush1.msra.mxu0 0.0
          %927 = vmatprep.subr.mxu0 0.0
          %928 = vmatpush1.msra.mxu0 0.0
          %929 = vmatprep.subr.mxu0 0.0
          %930 = vmatpush1.msra.mxu0 0.0
          %931 = vmatprep.mubr.f32.mxu0 0.0
          %932 = vmatmul.mubr.f32.gmra.mrb[0].mxu0 %v865
          %v933 = vpop.f32.mrb[0].mxu0
          %v934 = vadd.f32 0.0, %v933
          %v935 = vpop.f32.mrb[0].mxu0
          %936 = vdwg.mxu0
          %v937 = vmax.f32 %v934, 0.0
          %v939 = vsel %vm703, %v857, 0
          %v942 = vsel %vm716, %v937, 0
          %944 = vmatprep.subr.mxu0 0.0
          %945 = vmatpush1.msra.mxu0 %v942
          %946 = vmatprep.subr.mxu0 0.0
          %947 = vmatpush1.msra.mxu0 0.0
          %948 = vmatprep.subr.mxu0 0.0
          %949 = vmatpush1.msra.mxu0 0.0
          %950 = vmatprep.subr.mxu0 0.0
          %951 = vmatpush1.msra.mxu0 0.0
          %952 = vmatprep.subr.mxu0 0.0
          %953 = vmatpush1.msra.mxu0 0.0
          %954 = vmatprep.subr.mxu0 0.0
          %955 = vmatpush1.msra.mxu0 0.0
          %956 = vmatprep.subr.mxu0 0.0
          %957 = vmatpush1.msra.mxu0 0.0
          %958 = vmatprep.subr.mxu0 0.0
          %959 = vmatpush1.msra.mxu0 0.0
          %960 = vmatprep.subr.mxu0 0.0
          %961 = vmatpush1.msra.mxu0 0.0
          %962 = vmatprep.subr.mxu0 0.0
          %963 = vmatpush1.msra.mxu0 0.0
          %964 = vmatprep.subr.mxu0 0.0
          %965 = vmatpush1.msra.mxu0 0.0
          %966 = vmatprep.subr.mxu0 0.0
          %967 = vmatpush1.msra.mxu0 0.0
          %968 = vmatprep.subr.mxu0 0.0
          %969 = vmatpush1.msra.mxu0 0.0
          %970 = vmatprep.subr.mxu0 0.0
          %971 = vmatpush1.msra.mxu0 0.0
          %972 = vmatprep.subr.mxu0 0.0
          %973 = vmatpush1.msra.mxu0 0.0
          %974 = vmatprep.subr.mxu0 0.0
          %975 = vmatpush1.msra.mxu0 0.0
          %976 = vmatprep.subr.mxu0 0.0
          %977 = vmatpush1.msra.mxu0 0.0
          %978 = vmatprep.subr.mxu0 0.0
          %979 = vmatpush1.msra.mxu0 0.0
          %980 = vmatprep.subr.mxu0 0.0
          %981 = vmatpush1.msra.mxu0 0.0
          %982 = vmatprep.subr.mxu0 0.0
          %983 = vmatpush1.msra.mxu0 0.0
          %984 = vmatprep.subr.mxu0 0.0
          %985 = vmatpush1.msra.mxu0 0.0
          %986 = vmatprep.subr.mxu0 0.0
          %987 = vmatpush1.msra.mxu0 0.0
          %988 = vmatprep.subr.mxu0 0.0
          %989 = vmatpush1.msra.mxu0 0.0
          %990 = vmatprep.subr.mxu0 0.0
          %991 = vmatpush1.msra.mxu0 0.0
          %992 = vmatprep.subr.mxu0 0.0
          %993 = vmatpush1.msra.mxu0 0.0
          %994 = vmatprep.subr.mxu0 0.0
          %995 = vmatpush1.msra.mxu0 0.0
          %996 = vmatprep.subr.mxu0 0.0
          %997 = vmatpush1.msra.mxu0 0.0
          %998 = vmatprep.subr.mxu0 0.0
          %999 = vmatpush1.msra.mxu0 0.0
          %1000 = vmatprep.subr.mxu0 0.0
          %1001 = vmatpush1.msra.mxu0 0.0
          %1002 = vmatprep.subr.mxu0 0.0
          %1003 = vmatpush1.msra.mxu0 0.0
          %1004 = vmatprep.subr.mxu0 0.0
          %1005 = vmatpush1.msra.mxu0 0.0
          %1006 = vmatprep.subr.mxu0 0.0
          %1007 = vmatpush1.msra.mxu0 0.0
          %1008 = vmatprep.mubr.f32.mxu0 0.0
          %1009 = vmatmul.mubr.f32.gmra.mrb[0].mxu0 %v939
          %v1010 = vpop.f32.mrb[0].mxu0
          %v1011 = vadd.f32 0.0, %v1010
          %v1012 = vpop.f32.mrb[0].mxu0
          %1013 = vdwg.mxu0
          %1015 = vrot.lane.b32.xlu0 %v1011, 127
          %v1016 = vpop.permute.xlu0 %1015
          %v1018 = vadd.f32 %v1011, %v1016
          %v1019 = vxor.u32 %v1018, 2147483648
          %v1020 = vmul.f32 %v1019, 1.442695
          %v1021 = vpow.pop %v1020
          %v1022 = vadd.f32 %v1021, 1.0
          %v1023 = vrcp.pop %v1022
          %v1024 = vmul.f32 1.0, %v1023
          %1025 = vst.msk [vmem:[%s497] sm:$0xff] %vm547, %v1024
        $region72: #{tpu_custom_call.1} parent=51 // pred_fallthru
          _
        %p1026 = scmp.lt.s32.totalorder %s31, 1
        %s1027 = scalar_select %p1026, %s31, 1
        %s1028 = smul.addr %s1027, 4
        %s1029 = smul.addr %s1028, 8
        %s1030 = scalar_lea.vmem %s8, %s1029
        %p1031 = scmp.lt.s32.totalorder %s31, 1
        %s1032 = scalar_select %p1031, %s31, 1
        %s1033 = smul.addr %s1032, 8
        %s1034 = scalar_lea.vmem %s9, %s1033
        // Predicated region
        $region73: #{tpu_custom_call.1} parent=51 // pred_check
          %p1035 = pneg %p253
        $region74: #{tpu_custom_call.1} parent=51 // pred_check_branch
          %1037 = sbr.rel (%p1035) target = $region76
        $region75: #{tpu_custom_call.1} parent=51 // pred_region
          _
        $region76: #{tpu_custom_call.1} parent=51 // pred_fallthru
          _
        // Predicated region
        $region77: #{tpu_custom_call.1} parent=51 // pred_check
          %p1038 = pneg %p279
        $region78: #{tpu_custom_call.1} parent=51 // pred_check_branch
          %1040 = sbr.rel (%p1038) target = $region80
        $region79: #{tpu_custom_call.1} parent=51 // pred_region
          _
        $region80: #{tpu_custom_call.1} parent=51 // pred_fallthru
          _
      $region52: #{tpu_custom_call.1} parent=5 // pred_fallthru
        _
      %p1041 = scmp.le.s32.totalorder 2, %s22
      // Predicated region
      $region81: #{tpu_custom_call.1} parent=5 // pred_check
        %p1042 = pneg %p1041
      $region82: #{tpu_custom_call.1} parent=5 // pred_check_branch
        %1044 = sbr.rel (%p1042) target = $region84
      $region83: #{tpu_custom_call.1} parent=5 // pred_region
        %s1045 = ssub.s32 %s22, 2
        // Predicated region
        $region85: #{tpu_custom_call.1} parent=83 // pred_check
          %p1046 = pneg %p259
        $region86: #{tpu_custom_call.1} parent=83 // pred_check_branch
          %1048 = sbr.rel (%p1046) target = $region88
        $region87: #{tpu_custom_call.1} parent=83 // pred_region
          %p1049 = scmp.lt.s32.totalorder %s33, 1
          %s1050 = scalar_select %p1049, %s33, 1
          %s1051 = smul.addr %s1050, 4
          %s1052 = smul.addr %s1051, 8
          %s1053 = scalar_lea.vmem %s8, %s1052
        $region88: #{tpu_custom_call.1} parent=83 // pred_fallthru
          _
        // Predicated region
        $region89: #{tpu_custom_call.1} parent=83 // pred_check
          %p1054 = pneg %p285
        $region90: #{tpu_custom_call.1} parent=83 // pred_check_branch
          %1056 = sbr.rel (%p1054) target = $region92
        $region91: #{tpu_custom_call.1} parent=83 // pred_region
          %p1057 = scmp.lt.s32.totalorder %s33, 1
          %s1058 = scalar_select %p1057, %s33, 1
          %s1059 = smul.addr %s1058, 8
          %s1060 = scalar_lea.vmem %s9, %s1059
        $region92: #{tpu_custom_call.1} parent=83 // pred_fallthru
          _
      $region84: #{tpu_custom_call.1} parent=5 // pred_fallthru
        _
    $region6: #{tpu_custom_call.1} parent=1 // loop_footer
      %s26 = sadd.s32 1, %s22
    $region7: #{tpu_custom_call.1} parent=1 // loop_footer_branch
      %21 = sbr.rel target = $region3
    $region8: #{tpu_custom_call.1} parent=1 // loop_exit
      _
    %1061 = vsyncpa [#allocation7], 1
    %s1062 = scalar_lea.sflag [#allocation7], 1
    %1063 = vsyncpa %s1062, 1
    %1064 = vsyncpa [#allocation9], 1
    %s1065 = scalar_lea.sflag [#allocation9], 1
    %1066 = vsyncpa %s1065, 1

</llo_original>
